<compile_context>
chip_gen: v7x
topology: tpu7x:2x2x1
jax: 0.10.0
libtpu: 0.0.40
codegen_flags: <defaults>
</compile_context>

<pallas_src>
import functools

import jax
import jax.numpy as jnp
import numpy as np
from jax.experimental import pallas as pl
from jax.experimental.pallas import tpu as pltpu

EPS = 1e-5
LANE = 128


# ----------------------------------------------------------------------------
# Fused (BN scale/shift + ReLU + zero-pad) -> 3D conv kernel.
# ----------------------------------------------------------------------------
def _conv_bn_relu_kernel(x_ref, a_ref, b_ref, w_ref, o_ref, pbuf,
                         *, K, pad, TD, D, H, W, Cin, Cout, CK):
    dt = pl.program_id(1)
    WCin = W * Cin
    WCout = W * Cout

    # ------------------------------------------------------------------
    # Once per batch element: build K H-shifted "tap strips" of the
    # normalized, zero-padded volume in VMEM (bf16).
    #   pbuf[p, h, kh*CK + win*Cin + ci] = padded[p, h + kh, win, ci]
    # (zeros for the W halo, H halo and pad-to-CK lanes).  Only the depth
    # halo planes need explicit zeroing; everything else is overwritten.
    # ------------------------------------------------------------------
    @pl.when(dt == 0)
    def _():
        if pad:
            zplane = jnp.zeros((pad, H, K * CK), pbuf.dtype)
            pbuf[0:pad, :, :] = zplane
            pbuf[pad + D:pad + D + pad, :, :] = zplane

        a = a_ref[...]                                  # (1, WCin) f32
        b = b_ref[...]
        lpad_r = CK - pad * Cin - WCin                  # right lane padding

        @pl.loop(0, D)
        def _(d):
            # BN scale/shift + ReLU in f32 (VPU), one depth plane at a time
            # (trivial vreg pressure; runs once per batch element).
            y = jnp.maximum(x_ref[0, d].astype(jnp.float32) * a + b, 0.0)
            pieces = []
            if pad * Cin:
                pieces.append(jnp.zeros((H, pad * Cin), jnp.float32))
            pieces.append(y)
            if lpad_r:
                pieces.append(jnp.zeros((H, lpad_r), jnp.float32))
            yp = jnp.concatenate(pieces, -1) if len(pieces) > 1 else y   # (H, CK)
            if pad:
                zrow = jnp.zeros((pad, CK), jnp.float32)
                yph = jnp.concatenate([zrow, yp, zrow], 0)               # (Hp, CK)
            else:
                yph = yp
            for kh in range(K):                          # static unroll (K taps)
                pbuf[pad + d, :, kh * CK:(kh + 1) * CK] = (
                    yph[kh:kh + H, :].astype(pbuf.dtype))

    # ------------------------------------------------------------------
    # Conv for TD output depth slices: K MXU matmuls (one per kd tap);
    # kh, kw and Cin folded into the Kc = K*CK contraction, (w, Cout) on the
    # lane-dense output dim.  LHS loads are contiguous major-dim slices
    # (aligned, unmasked); bf16 operands, f32 accumulation.
    # ------------------------------------------------------------------
    d0 = pl.multiple_of(dt * TD, TD)
    acc = jnp.zeros((TD * H, WCout), jnp.float32)
    for kd in range(K):
        lhs = pbuf[pl.ds(d0 + kd, TD)]                   # (TD, H, K*CK) bf16
        lhs = lhs.reshape(TD * H, K * CK)                # free: H is a full tile
        acc = acc + jnp.dot(lhs, w_ref[kd],
                            preferred_element_type=jnp.float32)

    o_ref[...] = acc.reshape(1, TD, H, WCout).astype(o_ref.dtype)


def _conv3d_bn_relu_pallas(x3, a_t, b_t, wb, *, K, pad, TD, D, H, W,
                           Cin, Cout, CK):
    N = x3.shape[0]
    Dp = D + 2 * pad
    WCin, WCout = W * Cin, W * Cout
    n_dt = D // TD

    kernel = functools.partial(
        _conv_bn_relu_kernel, K=K, pad=pad, TD=TD, D=D, H=H, W=W,
        Cin=Cin, Cout=Cout, CK=CK)

    # Generous explicit scoped-VMEM budget (slab + double-buffered blocks).
    pbuf_bytes = Dp * H * K * CK * 2
    blk_bytes = (D * H * WCin * 2 + TD * H * WCout * 4
                 + K * K * CK * WCout * 2 + 2 * WCin * 4)
    vmem_limit = int(min(max(pbuf_bytes + 2 * blk_bytes + (4 << 20), 32 << 20),
                         64 << 20))

    return pl.pallas_call(
        kernel,
        out_shape=jax.ShapeDtypeStruct((N, D, H, WCout), jnp.float32),
        grid=(N, n_dt),
        in_specs=[
            # Raw bf16 activation: one block per batch element, revisited
            # across its depth tiles (single HBM->VMEM DMA per n).
            pl.BlockSpec((1, D, H, WCin), lambda n, d: (n, 0, 0, 0)),
            pl.BlockSpec((1, WCin), lambda n, d: (0, 0)),
            pl.BlockSpec((1, WCin), lambda n, d: (0, 0)),
            pl.BlockSpec((K, K * CK, WCout), lambda n, d: (0, 0, 0)),
        ],
        out_specs=pl.BlockSpec((1, TD, H, WCout), lambda n, d: (n, d, 0, 0)),
        scratch_shapes=[pltpu.VMEM((Dp, H, K * CK), jnp.bfloat16)],
        compiler_params=pltpu.CompilerParams(
            dimension_semantics=("parallel", "arbitrary"),
            vmem_limit_bytes=vmem_limit),
    )(x3, a_t, b_t, wb)


# ----------------------------------------------------------------------------
# Wrapper: NCDHW in -> NCDHW out (PyTorch convention).
# ----------------------------------------------------------------------------
def conv3d_block_forward(x_ncdhw, gamma, beta, w_oidhw, kernel_size,
                         stride=1, groups=1, padding=None):
    K = int(kernel_size)
    if padding is None:
        padding = (K - 1) // 2
    # TODO(synk): stride>1 / groups>1 / non-'same' padding not implemented.
    assert stride == 1 and groups == 1 and K % 2 == 1 and padding == (K - 1) // 2
    pad = padding

    N, Cin, D, H, W = x_ncdhw.shape
    Cout = w_oidhw.shape[0]
    Wp = W + 2 * pad
    WCin, WCout = W * Cin, W * Cout
    CK = -(-(Wp * Cin) // LANE) * LANE     # per-tap contraction, padded to 128

    # BatchNorm3d training-mode batch stats (biased var) as an f32 XLA
    # reduction over the ORIGINAL NCDHW tensor; the normalize itself is fused
    # into the conv kernel as y = relu(a*x + b).
    xf = x_ncdhw.astype(jnp.float32)
    mean = jnp.mean(xf, axis=(0, 2, 3, 4))
    var = jnp.var(xf, axis=(0, 2, 3, 4))
    a = gamma.astype(jnp.float32) * jax.lax.rsqrt(var + EPS)
    b = beta.astype(jnp.float32) - mean * a

    # Channels-last with (W, Cin) merged on the lane axis, in bf16 (halves the
    # only large recurring HBM read; conv operands are bf16 at the MXU anyway).
    x3 = (jnp.transpose(x_ncdhw, (0, 2, 3, 4, 1))
          .reshape(N, D, H, WCin).astype(jnp.bfloat16))
    a_t = jnp.tile(a, W).reshape(1, WCin)
    b_t = jnp.tile(b, W).reshape(1, WCin)

    # Banded ("lowered along W") weight with kh folded into the contraction:
    #   wb[kd, kh*CK + win*Cin + ci, w*Cout + co] = w[co, ci, kd, kh, win - w]
    #   (0 unless 0 <= win - w < K; contraction rows Wp*Cin..CK-1 are zero).
    w_t = jnp.transpose(w_oidhw, (2, 3, 4, 1, 0)).astype(jnp.float32)  # (K,K,K,Cin,Cout)
    win = jnp.arange(Wp)[:, None]
    wout = jnp.arange(W)[None, :]
    wb = jnp.zeros((K, K, Wp, Cin, W, Cout), jnp.float32)
    for kw in range(K):
        band = (win == wout + kw).astype(jnp.float32)                  # (Wp, W)
        wb = wb + (band[None, None, :, None, :, None] *
                   w_t[:, :, kw][:, :, None, :, None, :])
    wb = wb.reshape(K, K, Wp * Cin, WCout)
    wb = jnp.pad(wb, ((0, 0), (0, 0), (0, CK - Wp * Cin), (0, 0)))
    wb = wb.reshape(K, K * CK, WCout).astype(jnp.bfloat16)

    # Depth tile: target matmul M = TD*H ~ 128 rows (f32 accumulator ~64 KiB),
    # constrained to divide D.
    td_target = max(1, min(D, max(1, 128 // H)))
    TD = next(t for t in range(td_target, 0, -1) if D % t == 0)

    out = _conv3d_bn_relu_pallas(x3, a_t, b_t, wb, K=K, pad=pad, TD=TD,
                                 D=D, H=H, W=W, Cin=Cin, Cout=Cout, CK=CK)
    out = out.reshape(N, D, H, W, Cout)                  # un-flatten lanes
    # TODO(synk): the output NCDHW transpose is still a wrapper-side XLA pass.
    return jnp.transpose(out, (0, 4, 1, 2, 3)).astype(x_ncdhw.dtype)


# ----------------------------------------------------------------------------
# Pure-JAX reference (mirrors the PyTorch forward) for a sanity check.
# ----------------------------------------------------------------------------
def reference_forward(x, gamma, beta, w, kernel_size):
    pad = (kernel_size - 1) // 2
    mean = jnp.mean(x, axis=(0, 2, 3, 4), keepdims=True)
    var = jnp.var(x, axis=(0, 2, 3, 4), keepdims=True)
    h = (x - mean) * jax.lax.rsqrt(var + EPS)
    h = h * gamma.reshape(1, -1, 1, 1, 1) + beta.reshape(1, -1, 1, 1, 1)
    h = jnp.maximum(h, 0.0)
    return jax.lax.conv_general_dilated(
        h, w, window_strides=(1, 1, 1), padding=[(pad, pad)] * 3,
        dimension_numbers=("NCDHW", "OIDHW", "NCDHW"),
        precision=jax.lax.Precision.HIGHEST)


if __name__ == "__main__":
    # Conv3d_Block(num_in=4, num_out=8, kernel_size=3, stride=1, g=1, norm='bn')
    N, Cin, Cout, D, H, W, K = 2, 4, 8, 16, 16, 16, 3

    key = jax.random.PRNGKey(0)
    k1, k2, k3, k4 = jax.random.split(key, 4)
    x = jax.random.normal(k1, (N, Cin, D, H, W), jnp.float32)       # NCDHW
    gamma = 1.0 + 0.1 * jax.random.normal(k2, (Cin,), jnp.float32)  # BN weight
    beta = 0.1 * jax.random.normal(k3, (Cin,), jnp.float32)         # BN bias
    w = 0.1 * jax.random.normal(k4, (Cout, Cin, K, K, K), jnp.float32)  # OIDHW

    fwd = jax.jit(conv3d_block_forward,
                  static_argnames=("kernel_size", "stride", "groups", "padding"))
    out = jax.block_until_ready(fwd(x, gamma, beta, w, kernel_size=K))
    assert out.shape == (N, Cout, D, H, W), out.shape

    ref = jax.block_until_ready(reference_forward(x, gamma, beta, w, K))
    # bf16 MXU operands (input, BN output, weights; f32 accumulation) ->
    # tolerance reflects bf16 rounding.
    np.testing.assert_allclose(np.asarray(out), np.asarray(ref),
                               rtol=2e-2, atol=3e-2)
    print("KERNEL_OK")
</pallas_src>

<mosaic_0001>
module attributes {stable_mosaic.version = 11 : i64} {
  func.func @_conv_bn_relu_kernel(%arg0: i32, %arg1: i32, %arg2: memref<1x16x16x64xbf16, #tpu.memory_space<vmem>>, %arg3: memref<1x64xf32, #tpu.memory_space<vmem>>, %arg4: memref<1x64xf32, #tpu.memory_space<vmem>>, %arg5: memref<3x384x128xbf16, #tpu.memory_space<vmem>>, %arg6: memref<1x8x16x128xf32, #tpu.memory_space<vmem>>, %arg7: memref<18x16x384xbf16, #tpu.memory_space<vmem>>) attributes {dimension_semantics = [#tpu.dimension_semantics<parallel>, #tpu.dimension_semantics<arbitrary>], iteration_bounds = array<i64: 2, 2>, scalar_prefetch = 0 : i64, scratch_operands = 1 : i64, tpu.core_type = #tpu.core_type<tc>, window_params = [{transform_indices = @transform_0, window_bounds = array<i64: 1, 16, 16, 64>}, {pipeline_mode = #tpu.pipeline_mode<synchronous>, transform_indices = @transform_1, window_bounds = array<i64: 1, 64>}, {pipeline_mode = #tpu.pipeline_mode<synchronous>, transform_indices = @transform_2, window_bounds = array<i64: 1, 64>}, {pipeline_mode = #tpu.pipeline_mode<synchronous>, transform_indices = @transform_3, window_bounds = array<i64: 3, 384, 128>}, {transform_indices = @transform_4, window_bounds = array<i64: 1, 8, 16, 128>}]} {
    %c0_i32 = arith.constant 0 : i32
    %0 = arith.cmpi eq, %arg1, %c0_i32 : i32
    %1 = arith.extui %0 : i1 to i32
    %c0_i32_0 = arith.constant 0 : i32
    %2 = arith.cmpi ne, %1, %c0_i32_0 : i32
    scf.if %2 {
      %cst_21 = arith.constant 0.000000e+00 : bf16
      %32 = vector.broadcast %cst_21 : bf16 to vector<1x16x384xbf16>
      %c0_22 = arith.constant 0 : index
      %c0_23 = arith.constant 0 : index
      %c0_24 = arith.constant 0 : index
      %33 = vector.load %arg7[%c0_22, %c0_23, %c0_24] : memref<18x16x384xbf16, #tpu.memory_space<vmem>>, vector<1x16x384xbf16>
      tpu.vector_store %arg7[%c0_22, %c0_23, %c0_24], %32 {strides = array<i32>} : memref<18x16x384xbf16, #tpu.memory_space<vmem>>, vector<1x16x384xbf16>,
      %c17 = arith.constant 17 : index
      %c0_25 = arith.constant 0 : index
      %c0_26 = arith.constant 0 : index
      %34 = vector.load %arg7[%c17, %c0_25, %c0_26] : memref<18x16x384xbf16, #tpu.memory_space<vmem>>, vector<1x16x384xbf16>
      tpu.vector_store %arg7[%c17, %c0_25, %c0_26], %32 {strides = array<i32>} : memref<18x16x384xbf16, #tpu.memory_space<vmem>>, vector<1x16x384xbf16>,
      %c0_27 = arith.constant 0 : index
      %c0_28 = arith.constant 0 : index
      %35 = vector.load %arg3[%c0_27, %c0_28] : memref<1x64xf32, #tpu.memory_space<vmem>>, vector<1x64xf32>
      %c0_29 = arith.constant 0 : index
      %c0_30 = arith.constant 0 : index
      %36 = vector.load %arg4[%c0_29, %c0_30] : memref<1x64xf32, #tpu.memory_space<vmem>>, vector<1x64xf32>
      %c0_i32_31 = arith.constant 0 : i32
      %c16_i32 = arith.constant 16 : i32
      %37 = arith.addi %c0_i32_31, %c16_i32 : i32
      %c1_i32_32 = arith.constant 1 : i32
      scf.for %arg8 = %c0_i32_31 to %37 step %c1_i32_32  : i32 {
        %c1_i32_34 = arith.constant 1 : i32
        %38 = arith.muli %arg8, %c1_i32_34 : i32
        %c0_i32_35 = arith.constant 0 : i32
        %39 = arith.addi %c0_i32_35, %38 : i32
        %c0_36 = arith.constant 0 : index
        %40 = arith.index_cast %39 : i32 to index
        %c0_37 = arith.constant 0 : index
        %c0_38 = arith.constant 0 : index
        %41 = vector.load %arg2[%c0_36, %40, %c0_37, %c0_38] : memref<1x16x16x64xbf16, #tpu.memory_space<vmem>>, vector<1x1x16x64xbf16>
        %42 = vector.shape_cast %41 : vector<1x1x16x64xbf16> to vector<16x64xbf16>
        %43 = arith.extf %42 : vector<16x64xbf16> to vector<16x64xf32>
        %44 = vector.broadcast %35 : vector<1x64xf32> to vector<16x64xf32>
        %45 = arith.mulf %43, %44 : vector<16x64xf32>
        %46 = vector.broadcast %36 : vector<1x64xf32> to vector<16x64xf32>
        %47 = arith.addf %45, %46 : vector<16x64xf32>
        %cst_39 = arith.constant 0.000000e+00 : f32
        %48 = vector.broadcast %cst_39 : f32 to vector<16x64xf32>
        %49 = arith.maximumf %47, %48 : vector<16x64xf32>
        %cst_40 = arith.constant 0.000000e+00 : f32
        %50 = vector.broadcast %cst_40 : f32 to vector<16x4xf32>
        %cst_41 = arith.constant 0.000000e+00 : f32
        %51 = vector.broadcast %cst_41 : f32 to vector<16x60xf32>
        %52 = tpu.concatenate %50, %49, %51 in 1 : vector<16x4xf32>, vector<16x64xf32>, vector<16x60xf32> -> vector<16x128xf32>
        %cst_42 = arith.constant 0.000000e+00 : f32
        %53 = vector.broadcast %cst_42 : f32 to vector<1x128xf32>
        %54 = tpu.concatenate %53, %52, %53 in 0 : vector<1x128xf32>, vector<16x128xf32>, vector<1x128xf32> -> vector<18x128xf32>
        %55 = vector.extract_strided_slice %54 {offsets = [0, 0], sizes = [16, 128], strides = [1, 1]} : vector<18x128xf32> to vector<16x128xf32>
        %56 = arith.truncf %55 : vector<16x128xf32> to vector<16x128xbf16>
        %c1_i32_43 = arith.constant 1 : i32
        %57 = arith.addi %c1_i32_43, %39 : i32
        %58 = arith.index_cast %57 : i32 to index
        %c0_44 = arith.constant 0 : index
        %c0_45 = arith.constant 0 : index
        %59 = vector.load %arg7[%58, %c0_44, %c0_45] : memref<18x16x384xbf16, #tpu.memory_space<vmem>>, vector<1x16x128xbf16>
        %60 = vector.shape_cast %59 : vector<1x16x128xbf16> to vector<16x128xbf16>
        %61 = vector.shape_cast %56 : vector<16x128xbf16> to vector<1x16x128xbf16>
        tpu.vector_store %arg7[%58, %c0_44, %c0_45], %61 {strides = array<i32>} : memref<18x16x384xbf16, #tpu.memory_space<vmem>>, vector<1x16x128xbf16>,
        %62 = vector.extract_strided_slice %54 {offsets = [1, 0], sizes = [16, 128], strides = [1, 1]} : vector<18x128xf32> to vector<16x128xf32>
        %63 = arith.truncf %62 : vector<16x128xf32> to vector<16x128xbf16>
        %c1_i32_46 = arith.constant 1 : i32
        %64 = arith.addi %c1_i32_46, %39 : i32
        %65 = arith.index_cast %64 : i32 to index
        %c0_47 = arith.constant 0 : index
        %c128 = arith.constant 128 : index
        %66 = vector.load %arg7[%65, %c0_47, %c128] : memref<18x16x384xbf16, #tpu.memory_space<vmem>>, vector<1x16x128xbf16>
        %67 = vector.shape_cast %66 : vector<1x16x128xbf16> to vector<16x128xbf16>
        %68 = vector.shape_cast %63 : vector<16x128xbf16> to vector<1x16x128xbf16>
        tpu.vector_store %arg7[%65, %c0_47, %c128], %68 {strides = array<i32>} : memref<18x16x384xbf16, #tpu.memory_space<vmem>>, vector<1x16x128xbf16>,
        %69 = vector.extract_strided_slice %54 {offsets = [2, 0], sizes = [16, 128], strides = [1, 1]} : vector<18x128xf32> to vector<16x128xf32>
        %70 = arith.truncf %69 : vector<16x128xf32> to vector<16x128xbf16>
        %c1_i32_48 = arith.constant 1 : i32
        %71 = arith.addi %c1_i32_48, %39 : i32
        %72 = arith.index_cast %71 : i32 to index
        %c0_49 = arith.constant 0 : index
        %c256 = arith.constant 256 : index
        %73 = vector.load %arg7[%72, %c0_49, %c256] : memref<18x16x384xbf16, #tpu.memory_space<vmem>>, vector<1x16x128xbf16>
        %74 = vector.shape_cast %73 : vector<1x16x128xbf16> to vector<16x128xbf16>
        %75 = vector.shape_cast %70 : vector<16x128xbf16> to vector<1x16x128xbf16>
        tpu.vector_store %arg7[%72, %c0_49, %c256], %75 {strides = array<i32>} : memref<18x16x384xbf16, #tpu.memory_space<vmem>>, vector<1x16x128xbf16>,
      }
      %c16_i32_33 = arith.constant 16 : i32
    } else {
    }
    %c8_i32 = arith.constant 8 : i32
    %3 = arith.muli %arg1, %c8_i32 : i32
    %4 = tpu.assume_multiple %3, 8 : i32
    %cst = arith.constant 0.000000e+00 : f32
    %5 = vector.broadcast %cst : f32 to vector<128x128xf32>
    %c0_i32_1 = arith.constant 0 : i32
    %6 = arith.addi %4, %c0_i32_1 : i32
    %7 = arith.index_cast %6 : i32 to index
    %c0 = arith.constant 0 : index
    %c0_2 = arith.constant 0 : index
    %8 = vector.load %arg7[%7, %c0, %c0_2] : memref<18x16x384xbf16, #tpu.memory_space<vmem>>, vector<8x16x384xbf16>
    %9 = vector.shape_cast %8 : vector<8x16x384xbf16> to vector<128x384xbf16>
    %c0_3 = arith.constant 0 : index
    %c0_4 = arith.constant 0 : index
    %c0_5 = arith.constant 0 : index
    %10 = vector.load %arg5[%c0_3, %c0_4, %c0_5] : memref<3x384x128xbf16, #tpu.memory_space<vmem>>, vector<1x384x128xbf16>
    %11 = vector.shape_cast %10 : vector<1x384x128xbf16> to vector<384x128xbf16>
    %cst_6 = arith.constant dense<0.000000e+00> : vector<128x128xf32>
    %12 = tpu.matmul %9, %11, %cst_6 {dimension_numbers = #tpu.dot_dimension_numbers<[1], [0], [0], [1], [0, 0, 1, 1], [], []>} : vector<128x384xbf16>, vector<384x128xbf16>, vector<128x128xf32> -> vector<128x128xf32>
    %13 = arith.addf %5, %12 : vector<128x128xf32>
    %c1_i32 = arith.constant 1 : i32
    %14 = arith.addi %4, %c1_i32 : i32
    %15 = arith.index_cast %14 : i32 to index
    %c0_7 = arith.constant 0 : index
    %c0_8 = arith.constant 0 : index
    %16 = vector.load %arg7[%15, %c0_7, %c0_8] : memref<18x16x384xbf16, #tpu.memory_space<vmem>>, vector<8x16x384xbf16>
    %17 = vector.shape_cast %16 : vector<8x16x384xbf16> to vector<128x384xbf16>
    %c1 = arith.constant 1 : index
    %c0_9 = arith.constant 0 : index
    %c0_10 = arith.constant 0 : index
    %18 = vector.load %arg5[%c1, %c0_9, %c0_10] : memref<3x384x128xbf16, #tpu.memory_space<vmem>>, vector<1x384x128xbf16>
    %19 = vector.shape_cast %18 : vector<1x384x128xbf16> to vector<384x128xbf16>
    %cst_11 = arith.constant dense<0.000000e+00> : vector<128x128xf32>
    %20 = tpu.matmul %17, %19, %cst_11 {dimension_numbers = #tpu.dot_dimension_numbers<[1], [0], [0], [1], [0, 0, 1, 1], [], []>} : vector<128x384xbf16>, vector<384x128xbf16>, vector<128x128xf32> -> vector<128x128xf32>
    %21 = arith.addf %13, %20 : vector<128x128xf32>
    %c2_i32 = arith.constant 2 : i32
    %22 = arith.addi %4, %c2_i32 : i32
    %23 = arith.index_cast %22 : i32 to index
    %c0_12 = arith.constant 0 : index
    %c0_13 = arith.constant 0 : index
    %24 = vector.load %arg7[%23, %c0_12, %c0_13] : memref<18x16x384xbf16, #tpu.memory_space<vmem>>, vector<8x16x384xbf16>
    %25 = vector.shape_cast %24 : vector<8x16x384xbf16> to vector<128x384xbf16>
    %c2 = arith.constant 2 : index
    %c0_14 = arith.constant 0 : index
    %c0_15 = arith.constant 0 : index
    %26 = vector.load %arg5[%c2, %c0_14, %c0_15] : memref<3x384x128xbf16, #tpu.memory_space<vmem>>, vector<1x384x128xbf16>
    %27 = vector.shape_cast %26 : vector<1x384x128xbf16> to vector<384x128xbf16>
    %cst_16 = arith.constant dense<0.000000e+00> : vector<128x128xf32>
    %28 = tpu.matmul %25, %27, %cst_16 {dimension_numbers = #tpu.dot_dimension_numbers<[1], [0], [0], [1], [0, 0, 1, 1], [], []>} : vector<128x384xbf16>, vector<384x128xbf16>, vector<128x128xf32> -> vector<128x128xf32>
    %29 = arith.addf %21, %28 : vector<128x128xf32>
    %30 = vector.shape_cast %29 : vector<128x128xf32> to vector<1x8x16x128xf32>
    %c0_17 = arith.constant 0 : index
    %c0_18 = arith.constant 0 : index
    %c0_19 = arith.constant 0 : index
    %c0_20 = arith.constant 0 : index
    %31 = vector.load %arg6[%c0_17, %c0_18, %c0_19, %c0_20] : memref<1x8x16x128xf32, #tpu.memory_space<vmem>>, vector<1x8x16x128xf32>
    tpu.vector_store %arg6[%c0_17, %c0_18, %c0_19, %c0_20], %30 {strides = array<i32>} : memref<1x8x16x128xf32, #tpu.memory_space<vmem>>, vector<1x8x16x128xf32>,
    return
  }
  func.func @transform_0(%arg0: i32, %arg1: i32) -> (i32, i32, i32, i32) {
    %c0_i32 = arith.constant 0 : i32
    %c0_i32_0 = arith.constant 0 : i32
    %c0_i32_1 = arith.constant 0 : i32
    %c0_i32_2 = arith.constant 0 : i32
    return %arg0, %c0_i32, %c0_i32_0, %c0_i32_1 : i32, i32, i32, i32
  }
  func.func @transform_1(%arg0: i32, %arg1: i32) -> (i32, i32) {
    %c0_i32 = arith.constant 0 : i32
    %c0_i32_0 = arith.constant 0 : i32
    %c0_i32_1 = arith.constant 0 : i32
    return %c0_i32, %c0_i32_0 : i32, i32
  }
  func.func @transform_2(%arg0: i32, %arg1: i32) -> (i32, i32) {
    %c0_i32 = arith.constant 0 : i32
    %c0_i32_0 = arith.constant 0 : i32
    %c0_i32_1 = arith.constant 0 : i32
    return %c0_i32, %c0_i32_0 : i32, i32
  }
  func.func @transform_3(%arg0: i32, %arg1: i32) -> (i32, i32, i32) {
    %c0_i32 = arith.constant 0 : i32
    %c0_i32_0 = arith.constant 0 : i32
    %c0_i32_1 = arith.constant 0 : i32
    %c0_i32_2 = arith.constant 0 : i32
    return %c0_i32, %c0_i32_0, %c0_i32_1 : i32, i32, i32
  }
  func.func @transform_4(%arg0: i32, %arg1: i32) -> (i32, i32, i32, i32) {
    %c0_i32 = arith.constant 0 : i32
    %c0_i32_0 = arith.constant 0 : i32
    %c0_i32_1 = arith.constant 0 : i32
    return %arg0, %arg1, %c0_i32, %c0_i32_0 : i32, i32, i32, i32
  }
}

</mosaic_0001>

<llo_original>
// kernel: tile.13
$region0: #{tile.13}
  #allocation0 [shape = 's32[1]{0}', space=sflag, size = 0x4, scoped, tag = 'scoped memory for tile.13']
  %s0 = inlined_call_operand.vmem [shape: f32[4], index: 0, kind: input, shape index: {}]
  %s1 = inlined_call_operand.vmem [shape: f32[16,4], index: 1, kind: output, shape index: {}]
  // Predicated region
  $region2: #{tile.13} parent=0 // pred_check
    _
  $region3: #{tile.13} parent=0 // pred_check_branch
    %3 = sbr.rel (0) target = $region5
  $region4: #{tile.13} parent=0 // pred_region
    _
  $region5: #{tile.13} parent=0 // pred_fallthru
    _
  %v4 = vld [vmem:[%s0] ss:$0 sm:$0xff]
  %5 = vst [vmem:[%s1] sm:$0xff] %v4
  %s6 = scalar_lea.vmem %s1, 8
  %7 = vst [vmem:[%s6] sm:$0xff] %v4

// kernel: tile.14
$region0: #{tile.14}
  %s0 = inlined_call_operand.vmem [shape: f32[16,4], index: 0, kind: input, shape index: {}]
  %s1 = inlined_call_operand.vmem [shape: f32[1,64], index: 1, kind: output, shape index: {}]
  $region1: #{tile.14} parent=0
    #allocation0 [shape = 'u8[4096]{0}', space=vmem, size = 0x1000, scoped, tag = 'scoped mem for output reshape']
    %v2 = vld [vmem:[%s0] sm:$0x1]
    %vm3 = vcmask 31744
    %4 = vst.msk [vmem:[#allocation0] sm:$0x1] %vm3, %v2
    %s5 = scalar_lea.vmem %s0, 15
    %v6 = vld [vmem:[%s5] sm:$0x1]
    %7 = vrot.lane.b32.xlu0 %v6, 60
    %v8 = vpop.permute.xlu0 %7
    %vm9 = vcmask 523744
    %10 = vst.msk [vmem:[#allocation0] sm:$0x1] %vm9, %v8
    %s11 = scalar_lea.vmem %s0, 14
    %v12 = vld [vmem:[%s11] sm:$0x1]
    %13 = vrot.lane.b32.xlu0 %v12, 56
    %v14 = vpop.permute.xlu0 %13
    %vm15 = vcmask 490944
    %16 = vst.msk [vmem:[#allocation0] sm:$0x1] %vm15, %v14
    %s17 = scalar_lea.vmem %s0, 13
    %v18 = vld [vmem:[%s17] sm:$0x1]
    %19 = vrot.lane.b32.xlu0 %v18, 52
    %v20 = vpop.permute.xlu0 %19
    %vm21 = vcmask 458144
    %22 = vst.msk [vmem:[#allocation0] sm:$0x1] %vm21, %v20
    %s23 = scalar_lea.vmem %s0, 12
    %v24 = vld [vmem:[%s23] sm:$0x1]
    %25 = vrot.lane.b32.xlu0 %v24, 48
    %v26 = vpop.permute.xlu0 %25
    %vm27 = vcmask 425344
    %28 = vst.msk [vmem:[#allocation0] sm:$0x1] %vm27, %v26
    %s29 = scalar_lea.vmem %s0, 11
    %v30 = vld [vmem:[%s29] sm:$0x1]
    %31 = vrot.lane.b32.xlu0 %v30, 44
    %v32 = vpop.permute.xlu0 %31
    %vm33 = vcmask 392544
    %34 = vst.msk [vmem:[#allocation0] sm:$0x1] %vm33, %v32
    %s35 = scalar_lea.vmem %s0, 10
    %v36 = vld [vmem:[%s35] sm:$0x1]
    %37 = vrot.lane.b32.xlu0 %v36, 40
    %v38 = vpop.permute.xlu0 %37
    %vm39 = vcmask 359744
    %40 = vst.msk [vmem:[#allocation0] sm:$0x1] %vm39, %v38
    %s41 = scalar_lea.vmem %s0, 9
    %v42 = vld [vmem:[%s41] sm:$0x1]
    %43 = vrot.lane.b32.xlu0 %v42, 36
    %v44 = vpop.permute.xlu0 %43
    %vm45 = vcmask 326944
    %46 = vst.msk [vmem:[#allocation0] sm:$0x1] %vm45, %v44
    %s47 = scalar_lea.vmem %s0, 8
    %v48 = vld [vmem:[%s47] sm:$0x1]
    %49 = vrot.lane.b32.xlu0 %v48, 32
    %v50 = vpop.permute.xlu0 %49
    %vm51 = vcmask 294144
    %52 = vst.msk [vmem:[#allocation0] sm:$0x1] %vm51, %v50
    %s53 = scalar_lea.vmem %s0, 7
    %v54 = vld [vmem:[%s53] sm:$0x1]
    %55 = vrot.lane.b32.xlu0 %v54, 28
    %v56 = vpop.permute.xlu0 %55
    %vm57 = vcmask 261344
    %58 = vst.msk [vmem:[#allocation0] sm:$0x1] %vm57, %v56
    %s59 = scalar_lea.vmem %s0, 6
    %v60 = vld [vmem:[%s59] sm:$0x1]
    %61 = vrot.lane.b32.xlu0 %v60, 24
    %v62 = vpop.permute.xlu0 %61
    %vm63 = vcmask 228544
    %64 = vst.msk [vmem:[#allocation0] sm:$0x1] %vm63, %v62
    %s65 = scalar_lea.vmem %s0, 5
    %v66 = vld [vmem:[%s65] sm:$0x1]
    %67 = vrot.lane.b32.xlu0 %v66, 20
    %v68 = vpop.permute.xlu0 %67
    %vm69 = vcmask 195744
    %70 = vst.msk [vmem:[#allocation0] sm:$0x1] %vm69, %v68
    %s71 = scalar_lea.vmem %s0, 4
    %v72 = vld [vmem:[%s71] sm:$0x1]
    %73 = vrot.lane.b32.xlu0 %v72, 16
    %v74 = vpop.permute.xlu0 %73
    %vm75 = vcmask 162944
    %76 = vst.msk [vmem:[#allocation0] sm:$0x1] %vm75, %v74
    %s77 = scalar_lea.vmem %s0, 3
    %v78 = vld [vmem:[%s77] sm:$0x1]
    %79 = vrot.lane.b32.xlu0 %v78, 12
    %v80 = vpop.permute.xlu0 %79
    %vm81 = vcmask 130144
    %82 = vst.msk [vmem:[#allocation0] sm:$0x1] %vm81, %v80
    %s83 = scalar_lea.vmem %s0, 2
    %v84 = vld [vmem:[%s83] sm:$0x1]
    %85 = vrot.lane.b32.xlu0 %v84, 8
    %v86 = vpop.permute.xlu0 %85
    %vm87 = vcmask 97344
    %88 = vst.msk [vmem:[#allocation0] sm:$0x1] %vm87, %v86
    %s89 = scalar_lea.vmem %s0, 1
    %v90 = vld [vmem:[%s89] sm:$0x1]
    %91 = vrot.lane.b32.xlu0 %v90, 4
    %v92 = vpop.permute.xlu0 %91
    %vm93 = vcmask 64544
    %94 = vst.msk [vmem:[#allocation0] sm:$0x1] %vm93, %v92
    %s96 = sshllo.u32 0, 1
    %v98 = vld [vmem:[#allocation0] sm:%s96]
    %s99 = sshllo.u32 0, 1
    %100 = vst [vmem:[%s1] sm:%s99] %v98

// kernel: conv3d_block_forward.1
$region0: #{conv3d_block_forward.1}
  #allocation0 [shape = 'u32[]', space=smem, size = 0x4, offset = 0x4, fixed_abs, tag = 'smem constant byte address 0x4 - core index']
  #allocation1 [shape = 'u32[144,128]{1,0:T(1,128)}', space=vmem, size = 0x12000, scoped, tag = 'internal scratch']
  #allocation2 [shape = 'bf16[18,16,384]{2,1,0:T(16,128)(2,1)}', space=vmem, size = 0x36000, scoped, tag = 'scratch operand']
  %s0 = inlined_call_operand.vmem [shape: bf16[2,16,16,64], index: 0, kind: input, shape index: {}]
  %s1 = inlined_call_operand.vmem [shape: f32[1,64], index: 1, kind: input, shape index: {}]
  %s2 = inlined_call_operand.vmem [shape: f32[1,64], index: 2, kind: input, shape index: {}]
  %s3 = inlined_call_operand.vmem [shape: bf16[3,384,128], index: 3, kind: input, shape index: {}]
  %s4 = inlined_call_operand.vmem [shape: f32[2,16,16,128], index: 4, kind: output, shape index: {}]
  %s5 = sld [smem:[#allocation0]]
  $region60: #{conv3d_block_forward.1} parent=0
    _
  %s7 = ssub.s32 1, %s5
  %s8 = scalar_select 0, %s7, %s5
  loop: start=0, step=1, limit=6
  $region2: #{conv3d_block_forward.1} parent=0 // loop_pre_header
    _
  $region3: #{conv3d_block_forward.1} parent=0 // loop_header
    %s10 = sphi 0, %s14
    %p11 = scmp.ge.s32.totalorder %s10, 6
    %s17 = sphi 0, %s29
    %s18 = sphi 0, %s25
    %s19 = sphi 0, %s17
    %s20 = sphi 0, %s18
    %s21 = sphi 0, %s19
    %s22 = sphi 0, %s20
    %s32 = sphi 0, %s34
    %s35 = sphi 0, %s32
    %s36 = sphi 0, %s35
    %s52 = sphi 0, %s36
    %s56 = sphi 0, %s56
    %s58 = sphi 0, %s56
    %s59 = sphi 0, %s58
    %s73 = sphi 0, %s59
    %s77 = sphi 0, %s77
    %s79 = sphi 0, %s77
    %s80 = sphi 0, %s79
    %s94 = sphi 0, %s80
    %s98 = sphi 0, %s98
    %s100 = sphi 0, %s98
    %s101 = sphi 0, %s100
    %s115 = sphi 0, %s101
    %s123 = sphi 0, %s125
    %s126 = sphi 0, %s123
    %s127 = sphi 0, %s126
    %s143 = sphi 0, %s127
  $region4: #{conv3d_block_forward.1} parent=0 // loop_header_branch
    %13 = sbr.rel (%p11) target = $region8
  $region5: #{conv3d_block_forward.1} parent=0 // loop_body
    %s15 = ssub.s32 %s10, 1
    %s16 = ssub.s32 %s10, 2
    %s23 = sadd.s32 1, %s18
    %p24 = scmp.ge.s32.totalorder %s23, 2
    %s25 = scalar_select %p24, 0, %s23
    %s26 = sadd.s32 1, %s17
    %s27 = scalar_select %p24, %s26, %s17
    %p28 = scmp.ge.s32.totalorder %s27, 2
    %s29 = scalar_select %p28, 0, %s27
    %s30 = ssub.s32 %s17, %s29
    %p31 = scmp.eq.s32.totalorder %s30, 0
    %s33 = sadd.s32 %s32, 1
    %s34 = scalar_select %p31, %s32, %s33
    %p37 = pneg %p31
    %p38 = scmp.eq.s32.totalorder %s10, 3
    %p39 = por %p37, %p38
    %p40 = scmp.ne.s32.totalorder %s32, %s35
    %p41 = scmp.eq.s32.totalorder %s10, 0
    %p42 = por %p40, %p41
    %p43 = scmp.ne.s32.totalorder %s32, %s35
    %p44 = scmp.eq.s32.totalorder %s15, 3
    %p45 = por %p43, %p44
    %p46 = scmp.ne.s32.totalorder %s35, %s36
    %p47 = scmp.eq.s32.totalorder %s15, 0
    %p48 = por %p46, %p47
    %p49 = scmp.ne.s32.totalorder %s35, %s36
    %p50 = scmp.eq.s32.totalorder %s16, 3
    %p51 = por %p49, %p50
    %p53 = scmp.ne.s32.totalorder %s36, %s52
    %p54 = scmp.eq.s32.totalorder %s16, 0
    %p55 = por %p53, %p54
    %s57 = sadd.s32 %s56, 1
    %p60 = scmp.eq.s32.totalorder %s10, 3
    %p61 = scmp.ne.s32.totalorder %s56, %s58
    %p62 = scmp.eq.s32.totalorder %s10, 0
    %p63 = por %p61, %p62
    %p64 = scmp.ne.s32.totalorder %s56, %s58
    %p65 = scmp.eq.s32.totalorder %s15, 3
    %p66 = por %p64, %p65
    %p67 = scmp.ne.s32.totalorder %s58, %s59
    %p68 = scmp.eq.s32.totalorder %s15, 0
    %p69 = por %p67, %p68
    %p70 = scmp.ne.s32.totalorder %s58, %s59
    %p71 = scmp.eq.s32.totalorder %s16, 3
    %p72 = por %p70, %p71
    %p74 = scmp.ne.s32.totalorder %s59, %s73
    %p75 = scmp.eq.s32.totalorder %s16, 0
    %p76 = por %p74, %p75
    %s78 = sadd.s32 %s77, 1
    %p81 = scmp.eq.s32.totalorder %s10, 3
    %p82 = scmp.ne.s32.totalorder %s77, %s79
    %p83 = scmp.eq.s32.totalorder %s10, 0
    %p84 = por %p82, %p83
    %p85 = scmp.ne.s32.totalorder %s77, %s79
    %p86 = scmp.eq.s32.totalorder %s15, 3
    %p87 = por %p85, %p86
    %p88 = scmp.ne.s32.totalorder %s79, %s80
    %p89 = scmp.eq.s32.totalorder %s15, 0
    %p90 = por %p88, %p89
    %p91 = scmp.ne.s32.totalorder %s79, %s80
    %p92 = scmp.eq.s32.totalorder %s16, 3
    %p93 = por %p91, %p92
    %p95 = scmp.ne.s32.totalorder %s80, %s94
    %p96 = scmp.eq.s32.totalorder %s16, 0
    %p97 = por %p95, %p96
    %s99 = sadd.s32 %s98, 1
    %p102 = scmp.eq.s32.totalorder %s10, 3
    %p103 = scmp.ne.s32.totalorder %s98, %s100
    %p104 = scmp.eq.s32.totalorder %s10, 0
    %p105 = por %p103, %p104
    %p106 = scmp.ne.s32.totalorder %s98, %s100
    %p107 = scmp.eq.s32.totalorder %s15, 3
    %p108 = por %p106, %p107
    %p109 = scmp.ne.s32.totalorder %s100, %s101
    %p110 = scmp.eq.s32.totalorder %s15, 0
    %p111 = por %p109, %p110
    %p112 = scmp.ne.s32.totalorder %s100, %s101
    %p113 = scmp.eq.s32.totalorder %s16, 3
    %p114 = por %p112, %p113
    %p116 = scmp.ne.s32.totalorder %s101, %s115
    %p117 = scmp.eq.s32.totalorder %s16, 0
    %p118 = por %p116, %p117
    %s119 = ssub.s32 %s17, %s29
    %s120 = ssub.s32 %s18, %s25
    %s121 = sor.u32 %s119, %s120
    %p122 = scmp.eq.s32.totalorder %s121, 0
    %s124 = sadd.s32 %s123, 1
    %s125 = scalar_select %p122, %s123, %s124
    %p128 = pneg %p122
    %p129 = scmp.eq.s32.totalorder %s10, 3
    %p130 = por %p128, %p129
    %p131 = scmp.ne.s32.totalorder %s123, %s126
    %p132 = scmp.eq.s32.totalorder %s10, 0
    %p133 = por %p131, %p132
    %p134 = scmp.ne.s32.totalorder %s123, %s126
    %p135 = scmp.eq.s32.totalorder %s15, 3
    %p136 = por %p134, %p135
    %p137 = scmp.ne.s32.totalorder %s126, %s127
    %p138 = scmp.eq.s32.totalorder %s15, 0
    %p139 = por %p137, %p138
    %p140 = scmp.ne.s32.totalorder %s126, %s127
    %p141 = scmp.eq.s32.totalorder %s16, 3
    %p142 = por %p140, %p141
    %p144 = scmp.ne.s32.totalorder %s127, %s143
    %p145 = scmp.eq.s32.totalorder %s16, 0
    %p146 = por %p144, %p145
    %p147 = scmp.le.s32.totalorder 1, %s10
    %p148 = scmp.lt.s32.totalorder %s10, 5
    %p149 = pnand %p147, %p148
    %p150 = pneg %p149
    // Predicated region
    $region9: #{conv3d_block_forward.1} parent=5 // pred_check
      _
    $region10: #{conv3d_block_forward.1} parent=5 // pred_check_branch
      %152 = sbr.rel (%p149) target = $region12
    $region11: #{conv3d_block_forward.1} parent=5 // pred_region
      %s153 = ssub.s32 %s10, 1
      // Predicated region
      $region13: #{conv3d_block_forward.1} parent=11 // pred_check
        %p154 = pneg %p69
      $region14: #{conv3d_block_forward.1} parent=11 // pred_check_branch
        %156 = sbr.rel (%p154) target = $region16
      $region15: #{conv3d_block_forward.1} parent=11 // pred_region
        _
      $region16: #{conv3d_block_forward.1} parent=11 // pred_fallthru
        _
      // Predicated region
      $region17: #{conv3d_block_forward.1} parent=11 // pred_check
        %p157 = pneg %p90
      $region18: #{conv3d_block_forward.1} parent=11 // pred_check_branch
        %159 = sbr.rel (%p157) target = $region20
      $region19: #{conv3d_block_forward.1} parent=11 // pred_region
        _
      $region20: #{conv3d_block_forward.1} parent=11 // pred_fallthru
        _
      // Predicated region
      $region21: #{conv3d_block_forward.1} parent=11 // pred_check
        %p160 = pneg %p111
      $region22: #{conv3d_block_forward.1} parent=11 // pred_check_branch
        %162 = sbr.rel (%p160) target = $region24
      $region23: #{conv3d_block_forward.1} parent=11 // pred_region
        _
      $region24: #{conv3d_block_forward.1} parent=11 // pred_fallthru
        _
    $region12: #{conv3d_block_forward.1} parent=5 // pred_fallthru
      _
    %p163 = scmp.lt.s32.totalorder %s10, 4
    // Predicated region
    $region25: #{conv3d_block_forward.1} parent=5 // pred_check
      %p164 = pneg %p163
    $region26: #{conv3d_block_forward.1} parent=5 // pred_check_branch
      %166 = sbr.rel (%p164) target = $region28
    $region27: #{conv3d_block_forward.1} parent=5 // pred_region
      // Predicated region
      $region29: #{conv3d_block_forward.1} parent=27 // pred_check
        %p167 = pneg %p42
      $region30: #{conv3d_block_forward.1} parent=27 // pred_check_branch
        %169 = sbr.rel (%p167) target = $region32
      $region31: #{conv3d_block_forward.1} parent=27 // pred_region
        %p170 = scmp.lt.s32.totalorder %s17, 1
        %s171 = scalar_select %p170, %s17, 1
        %s172 = smul.addr %s171, 32
        %s173 = smul.addr %s172, 4
        %s174 = scalar_lea.vmem %s0, %s173
      $region32: #{conv3d_block_forward.1} parent=27 // pred_fallthru
        _
    $region28: #{conv3d_block_forward.1} parent=5 // pred_fallthru
      _
    %p175 = scmp.le.s32.totalorder 1, %s10
    %p176 = scmp.lt.s32.totalorder %s10, 5
    %p177 = pnand %p175, %p176
    %p178 = pneg %p177
    // Predicated region
    $region33: #{conv3d_block_forward.1} parent=5 // pred_check
      _
    $region34: #{conv3d_block_forward.1} parent=5 // pred_check_branch
      %180 = sbr.rel (%p177) target = $region36
    $region35: #{conv3d_block_forward.1} parent=5 // pred_region
      %s181 = ssub.s32 %s10, 1
      %p182 = scmp.lt.s32.totalorder %s19, 1
      %s183 = scalar_select %p182, %s19, 1
      %s184 = smul.addr %s183, 32
      %s185 = smul.addr %s184, 4
      %s186 = scalar_lea.vmem %s0, %s185
      %p187 = pneg %p48
      %p188 = pneg %p45
      %p189 = pneg %p69
      %p190 = pneg %p66
      %p191 = pneg %p90
      %p192 = pneg %p87
      %p193 = pneg %p111
      %p194 = pneg %p108
      %p195 = pneg %p139
      %p196 = pneg %p136
      %s197 = smul.u32 8, %s20
      %p198 = scmp.lt.s32.totalorder %s19, 1
      %s199 = scalar_select %p198, %s19, 1
      %p200 = scmp.lt.s32.totalorder %s197, 15
      %s201 = scalar_select %p200, %s197, 15
      %s202 = smul.addr %s201, 2
      %s203 = smul.addr %s199, 32
      %s204 = sadd.s32 %s202, %s203
      %s205 = smul.addr %s204, 8
      %s206 = scalar_lea.vmem %s4, %s205
      %p207 = scmp.lt.s32.totalorder %s19, 1
      %s208 = scalar_select %p207, %s19, 1
      %s209 = smul.addr %s208, 32
      %s210 = smul.addr %s209, 4
      %s211 = scalar_lea.vmem %s0, %s210
      %s212 = smul.u32 8, %s20
      %p213 = scmp.lt.s32.totalorder %s19, 1
      %s214 = scalar_select %p213, %s19, 1
      %p215 = scmp.lt.s32.totalorder %s212, 15
      %s216 = scalar_select %p215, %s212, 15
      %s217 = smul.addr %s216, 2
      %s218 = smul.addr %s214, 32
      %s219 = sadd.s32 %s217, %s218
      %s220 = smul.addr %s219, 8
      %s221 = scalar_lea.vmem %s4, %s220
      %s222 = smul.u32 8, %s20
      %p224 = scmp.eq.s32.totalorder %s20, 0
      // Predicated region
      $region37: #{conv3d_block_forward.1} parent=35 // pred_check
        %p225 = pneg %p224
      $region38: #{conv3d_block_forward.1} parent=35 // pred_check_branch
        %227 = sbr.rel (%p225) target = $region40
      $region39: #{conv3d_block_forward.1} parent=35 // pred_region
        %228 = vst [vmem:[#allocation2] sm:$0xff] 0
        %229 = vst [vmem:[#allocation2 + $0x8] sm:$0xff] 0
        %230 = vst [vmem:[#allocation2 + $0x10] sm:$0xff] 0
        %s231 = scalar_lea.vmem [#allocation2], 408
        %232 = vst [vmem:[%s231] sm:$0xff] 0
        %233 = vst [vmem:[%s231 + $0x8] sm:$0xff] 0
        %234 = vst [vmem:[%s231 + $0x10] sm:$0xff] 0
        %v235 = vld [vmem:[%s1] sm:$0x1]
        %v236 = vld [vmem:[%s2] sm:$0x1]
        loop: start=0, step=1, limit=16
        $region41: #{conv3d_block_forward.1} parent=39 // loop_pre_header
          _
        $region42: #{conv3d_block_forward.1} parent=39 // loop_header
          %s238 = sphi 0, %s242
          %p239 = scmp.ge.s32.totalorder %s238, 16
        $region43: #{conv3d_block_forward.1} parent=39 // loop_header_branch
          %241 = sbr.rel (%p239) target = $region47
        $region44: #{conv3d_block_forward.1} parent=39 // loop_body
          %s243 = smul.u32 %s238, 2
          %s244 = smul.addr %s243, 4
          %s245 = scalar_lea.vmem %s211, %s244
          %v246 = vld [vmem:[%s245] sm:$0xf]
          %v247 = vld [vmem:[%s245 + $0x4] sm:$0xf]
          %v248 = vunpack.c.l.bf16 %v246
          %v249 = vunpack.c.l.bf16 %v247
          %v251 = vlaneseq
          %v252 = vshrl.u32 %v251, 7
          %v253 = vsub.s32 0, %v252
          %v254 = vrot.slane %v235, %v253
          %v256 = vmul.f32 %v248, %v254
          %v257 = vmul.f32 %v249, %v254
          %v259 = vlaneseq
          %v260 = vshrl.u32 %v259, 7
          %v261 = vsub.s32 0, %v260
          %v262 = vrot.slane %v236, %v261
          %v264 = vadd.f32 %v256, %v262
          %v265 = vadd.f32 %v257, %v262
          %v266 = vmax.f32 %v264, 0.0
          %v267 = vmax.f32 %v265, 0.0
          %270 = vrot.lane.b32.xlu0 %v266, 4
          %v271 = vpop.permute.xlu0 %270
          %272 = vrot.lane.b32.xlu0 %v267, 4
          %v273 = vpop.permute.xlu0 %272
          %vm276 = vcmask 31744
          %v277 = vsel %vm276, 0.0, %v271
          %v278 = vsel %vm276, 0.0, %v273
          %vm279 = vcmask 556032
          %v280 = vsel %vm279, %v277, 0.0
          %v281 = vsel %vm279, %v278, 0.0
          %vm284 = vcmask 1040384
          %v285 = vrot.slane %v280, 7
          %v286 = vrot.slane %v281, 7
          %v287 = vsel %vm284, %v285, %v286
          %v291 = vsel %vm284, 0.0, %v285
          %v292 = vsel %vm284, %v286, 0.0
          %v293 = vpack.c.bf16 %v287, %v291
          %s294 = sadd.s32 %s238, 1
          %s295 = smul.u32 %s294, 3
          %s296 = smul.addr %s295, 8
          %s297 = scalar_lea.vmem [#allocation2], %s296
          %298 = vst [vmem:[%s297] sm:$0xff] %v293
          %v299 = vpack.c.bf16 %v292, %v292
          %vm300 = vsmask.f32 7424
          %v302 = vshrl.u32 %v293, 16
          %v304 = vshll.u32 %v293, 16
          %v306 = vrot.slane %v304, 1
          %v307 = vor.u32 %v302, %v306
          %v309 = vshll.u32 %v299, 16
          %v311 = vrot.slane %v309, 1
          %v312 = vsel %vm300, %v307, %v311
          %314 = vst [vmem:[%s297 + $0x8] sm:$0xff] %v312
          %vm317 = vcmask 1046528
          %v318 = vrot.slane %v293, 1
          %v319 = vrot.slane %v299, 1
          %v320 = vsel %vm317, %v318, %v319
          %322 = vst [vmem:[%s297 + $0x10] sm:$0xff] %v320
        $region45: #{conv3d_block_forward.1} parent=39 // loop_footer
          %s242 = sadd.s32 1, %s238
        $region46: #{conv3d_block_forward.1} parent=39 // loop_footer_branch
          %237 = sbr.rel target = $region42
        $region47: #{conv3d_block_forward.1} parent=39 // loop_exit
          _
      $region40: #{conv3d_block_forward.1} parent=35 // pred_fallthru
        _
      %s323 = smul.u32 %s20, 8
      %s324 = smul.u32 %s323, 3
      %s325 = smul.addr %s324, 8
      %s326 = scalar_lea.vmem [#allocation2], %s325
      %v327 = vld [vmem:[%s326] sm:$0xff]
      %v328 = vld [vmem:[%s326 + $0x8] sm:$0xff]
      %v329 = vld [vmem:[%s326 + $0x10] sm:$0xff]
      %v330 = vld [vmem:[%s326 + $0x18] sm:$0xff]
      %v331 = vld [vmem:[%s326 + $0x20] sm:$0xff]
      %v332 = vld [vmem:[%s326 + $0x28] sm:$0xff]
      %v333 = vld [vmem:[%s326 + $0x30] sm:$0xff]
      %v334 = vld [vmem:[%s326 + $0x38] sm:$0xff]
      %v335 = vld [vmem:[%s326 + $0x40] sm:$0xff]
      %v336 = vld [vmem:[%s326 + $0x48] sm:$0xff]
      %v337 = vld [vmem:[%s326 + $0x50] sm:$0xff]
      %v338 = vld [vmem:[%s326 + $0x58] sm:$0xff]
      %v339 = vld [vmem:[%s326 + $0x60] sm:$0xff]
      %v340 = vld [vmem:[%s326 + $0x68] sm:$0xff]
      %v341 = vld [vmem:[%s326 + $0x70] sm:$0xff]
      %v342 = vld [vmem:[%s326 + $0x78] sm:$0xff]
      %v343 = vld [vmem:[%s326 + $0x80] sm:$0xff]
      %v344 = vld [vmem:[%s326 + $0x88] sm:$0xff]
      %v345 = vld [vmem:[%s326 + $0x90] sm:$0xff]
      %v346 = vld [vmem:[%s326 + $0x98] sm:$0xff]
      %v347 = vld [vmem:[%s326 + $0xa0] sm:$0xff]
      %v348 = vld [vmem:[%s326 + $0xa8] sm:$0xff]
      %v349 = vld [vmem:[%s326 + $0xb0] sm:$0xff]
      %v350 = vld [vmem:[%s326 + $0xb8] sm:$0xff]
      %v351 = vld [vmem:[%s3] sm:$0xf]
      %v352 = vld [vmem:[%s3 + $0x4] sm:$0xf]
      %v353 = vld [vmem:[%s3 + $0x8] sm:$0xf]
      %v354 = vld [vmem:[%s3 + $0xc] sm:$0xf]
      %v355 = vld [vmem:[%s3 + $0x10] sm:$0xf]
      %v356 = vld [vmem:[%s3 + $0x14] sm:$0xf]
      %v357 = vld [vmem:[%s3 + $0x18] sm:$0xf]
      %v358 = vld [vmem:[%s3 + $0x1c] sm:$0xf]
      %v359 = vld [vmem:[%s3 + $0x20] sm:$0xf]
      %v360 = vld [vmem:[%s3 + $0x24] sm:$0xf]
      %v361 = vld [vmem:[%s3 + $0x28] sm:$0xf]
      %v362 = vld [vmem:[%s3 + $0x2c] sm:$0xf]
      %v363 = vld [vmem:[%s3 + $0x30] sm:$0xf]
      %v364 = vld [vmem:[%s3 + $0x34] sm:$0xf]
      %v365 = vld [vmem:[%s3 + $0x38] sm:$0xf]
      %v366 = vld [vmem:[%s3 + $0x3c] sm:$0xf]
      %v367 = vld [vmem:[%s3 + $0x40] sm:$0xf]
      %v368 = vld [vmem:[%s3 + $0x44] sm:$0xf]
      %v369 = vld [vmem:[%s3 + $0x48] sm:$0xf]
      %v370 = vld [vmem:[%s3 + $0x4c] sm:$0xf]
      %v371 = vld [vmem:[%s3 + $0x50] sm:$0xf]
      %v372 = vld [vmem:[%s3 + $0x54] sm:$0xf]
      %v373 = vld [vmem:[%s3 + $0x58] sm:$0xf]
      %v374 = vld [vmem:[%s3 + $0x5c] sm:$0xf]
      %v375 = vld [vmem:[%s3 + $0x60] sm:$0xf]
      %v376 = vld [vmem:[%s3 + $0x64] sm:$0xf]
      %v377 = vld [vmem:[%s3 + $0x68] sm:$0xf]
      %v378 = vld [vmem:[%s3 + $0x6c] sm:$0xf]
      %v379 = vld [vmem:[%s3 + $0x70] sm:$0xf]
      %v380 = vld [vmem:[%s3 + $0x74] sm:$0xf]
      %v381 = vld [vmem:[%s3 + $0x78] sm:$0xf]
      %v382 = vld [vmem:[%s3 + $0x7c] sm:$0xf]
      %v383 = vld [vmem:[%s3 + $0x80] sm:$0xf]
      %v384 = vld [vmem:[%s3 + $0x84] sm:$0xf]
      %v385 = vld [vmem:[%s3 + $0x88] sm:$0xf]
      %v386 = vld [vmem:[%s3 + $0x8c] sm:$0xf]
      %v387 = vld [vmem:[%s3 + $0x90] sm:$0xf]
      %v388 = vld [vmem:[%s3 + $0x94] sm:$0xf]
      %v389 = vld [vmem:[%s3 + $0x98] sm:$0xf]
      %v390 = vld [vmem:[%s3 + $0x9c] sm:$0xf]
      %v391 = vld [vmem:[%s3 + $0xa0] sm:$0xf]
      %v392 = vld [vmem:[%s3 + $0xa4] sm:$0xf]
      %v393 = vld [vmem:[%s3 + $0xa8] sm:$0xf]
      %v394 = vld [vmem:[%s3 + $0xac] sm:$0xf]
      %v395 = vld [vmem:[%s3 + $0xb0] sm:$0xf]
      %v396 = vld [vmem:[%s3 + $0xb4] sm:$0xf]
      %v397 = vld [vmem:[%s3 + $0xb8] sm:$0xf]
      %v398 = vld [vmem:[%s3 + $0xbc] sm:$0xf]
      %s399 = sadd.s32 %s323, 1
      %s400 = smul.u32 %s399, 3
      %s401 = smul.addr %s400, 8
      %s402 = scalar_lea.vmem [#allocation2], %s401
      %v403 = vld [vmem:[%s402] sm:$0xff]
      %v404 = vld [vmem:[%s402 + $0x8] sm:$0xff]
      %v405 = vld [vmem:[%s402 + $0x10] sm:$0xff]
      %v406 = vld [vmem:[%s402 + $0x18] sm:$0xff]
      %v407 = vld [vmem:[%s402 + $0x20] sm:$0xff]
      %v408 = vld [vmem:[%s402 + $0x28] sm:$0xff]
      %v409 = vld [vmem:[%s402 + $0x30] sm:$0xff]
      %v410 = vld [vmem:[%s402 + $0x38] sm:$0xff]
      %v411 = vld [vmem:[%s402 + $0x40] sm:$0xff]
      %v412 = vld [vmem:[%s402 + $0x48] sm:$0xff]
      %v413 = vld [vmem:[%s402 + $0x50] sm:$0xff]
      %v414 = vld [vmem:[%s402 + $0x58] sm:$0xff]
      %v415 = vld [vmem:[%s402 + $0x60] sm:$0xff]
      %v416 = vld [vmem:[%s402 + $0x68] sm:$0xff]
      %v417 = vld [vmem:[%s402 + $0x70] sm:$0xff]
      %v418 = vld [vmem:[%s402 + $0x78] sm:$0xff]
      %v419 = vld [vmem:[%s402 + $0x80] sm:$0xff]
      %v420 = vld [vmem:[%s402 + $0x88] sm:$0xff]
      %v421 = vld [vmem:[%s402 + $0x90] sm:$0xff]
      %v422 = vld [vmem:[%s402 + $0x98] sm:$0xff]
      %v423 = vld [vmem:[%s402 + $0xa0] sm:$0xff]
      %v424 = vld [vmem:[%s402 + $0xa8] sm:$0xff]
      %v425 = vld [vmem:[%s402 + $0xb0] sm:$0xff]
      %v426 = vld [vmem:[%s402 + $0xb8] sm:$0xff]
      %s427 = scalar_lea.vmem %s3, 192
      %v428 = vld [vmem:[%s427] sm:$0xf]
      %v429 = vld [vmem:[%s427 + $0x4] sm:$0xf]
      %v430 = vld [vmem:[%s427 + $0x8] sm:$0xf]
      %v431 = vld [vmem:[%s427 + $0xc] sm:$0xf]
      %v432 = vld [vmem:[%s427 + $0x10] sm:$0xf]
      %v433 = vld [vmem:[%s427 + $0x14] sm:$0xf]
      %v434 = vld [vmem:[%s427 + $0x18] sm:$0xf]
      %v435 = vld [vmem:[%s427 + $0x1c] sm:$0xf]
      %v436 = vld [vmem:[%s427 + $0x20] sm:$0xf]
      %v437 = vld [vmem:[%s427 + $0x24] sm:$0xf]
      %v438 = vld [vmem:[%s427 + $0x28] sm:$0xf]
      %v439 = vld [vmem:[%s427 + $0x2c] sm:$0xf]
      %v440 = vld [vmem:[%s427 + $0x30] sm:$0xf]
      %v441 = vld [vmem:[%s427 + $0x34] sm:$0xf]
      %v442 = vld [vmem:[%s427 + $0x38] sm:$0xf]
      %v443 = vld [vmem:[%s427 + $0x3c] sm:$0xf]
      %v444 = vld [vmem:[%s427 + $0x40] sm:$0xf]
      %v445 = vld [vmem:[%s427 + $0x44] sm:$0xf]
      %v446 = vld [vmem:[%s427 + $0x48] sm:$0xf]
      %v447 = vld [vmem:[%s427 + $0x4c] sm:$0xf]
      %v448 = vld [vmem:[%s427 + $0x50] sm:$0xf]
      %v449 = vld [vmem:[%s427 + $0x54] sm:$0xf]
      %v450 = vld [vmem:[%s427 + $0x58] sm:$0xf]
      %v451 = vld [vmem:[%s427 + $0x5c] sm:$0xf]
      %v452 = vld [vmem:[%s427 + $0x60] sm:$0xf]
      %v453 = vld [vmem:[%s427 + $0x64] sm:$0xf]
      %v454 = vld [vmem:[%s427 + $0x68] sm:$0xf]
      %v455 = vld [vmem:[%s427 + $0x6c] sm:$0xf]
      %v456 = vld [vmem:[%s427 + $0x70] sm:$0xf]
      %v457 = vld [vmem:[%s427 + $0x74] sm:$0xf]
      %v458 = vld [vmem:[%s427 + $0x78] sm:$0xf]
      %v459 = vld [vmem:[%s427 + $0x7c] sm:$0xf]
      %v460 = vld [vmem:[%s427 + $0x80] sm:$0xf]
      %v461 = vld [vmem:[%s427 + $0x84] sm:$0xf]
      %v462 = vld [vmem:[%s427 + $0x88] sm:$0xf]
      %v463 = vld [vmem:[%s427 + $0x8c] sm:$0xf]
      %v464 = vld [vmem:[%s427 + $0x90] sm:$0xf]
      %v465 = vld [vmem:[%s427 + $0x94] sm:$0xf]
      %v466 = vld [vmem:[%s427 + $0x98] sm:$0xf]
      %v467 = vld [vmem:[%s427 + $0x9c] sm:$0xf]
      %v468 = vld [vmem:[%s427 + $0xa0] sm:$0xf]
      %v469 = vld [vmem:[%s427 + $0xa4] sm:$0xf]
      %v470 = vld [vmem:[%s427 + $0xa8] sm:$0xf]
      %v471 = vld [vmem:[%s427 + $0xac] sm:$0xf]
      %v472 = vld [vmem:[%s427 + $0xb0] sm:$0xf]
      %v473 = vld [vmem:[%s427 + $0xb4] sm:$0xf]
      %v474 = vld [vmem:[%s427 + $0xb8] sm:$0xf]
      %v475 = vld [vmem:[%s427 + $0xbc] sm:$0xf]
      %v524 = vunpack.c.l.b16 %v428
      %v525 = vunpack.c.l.b16 %v429
      %v526 = vunpack.c.l.b16 %v430
      %v527 = vunpack.c.l.b16 %v431
      %v528 = vunpack.c.l.b16 %v432
      %v529 = vunpack.c.l.b16 %v433
      %v530 = vunpack.c.l.b16 %v434
      %v531 = vunpack.c.l.b16 %v435
      %v532 = vunpack.c.l.b16 %v436
      %v533 = vunpack.c.l.b16 %v437
      %v534 = vunpack.c.l.b16 %v438
      %v535 = vunpack.c.l.b16 %v439
      %v536 = vunpack.c.l.b16 %v440
      %v537 = vunpack.c.l.b16 %v441
      %v538 = vunpack.c.l.b16 %v442
      %v539 = vunpack.c.l.b16 %v443
      %v540 = vunpack.c.l.b16 %v444
      %v541 = vunpack.c.l.b16 %v445
      %v542 = vunpack.c.l.b16 %v446
      %v543 = vunpack.c.l.b16 %v447
      %v544 = vunpack.c.l.b16 %v448
      %v545 = vunpack.c.l.b16 %v449
      %v546 = vunpack.c.l.b16 %v450
      %v547 = vunpack.c.l.b16 %v451
      %v548 = vunpack.c.l.b16 %v452
      %v549 = vunpack.c.l.b16 %v453
      %v550 = vunpack.c.l.b16 %v454
      %v551 = vunpack.c.l.b16 %v455
      %v552 = vunpack.c.l.b16 %v456
      %v553 = vunpack.c.l.b16 %v457
      %v554 = vunpack.c.l.b16 %v458
      %v555 = vunpack.c.l.b16 %v459
      %v556 = vunpack.c.l.b16 %v460
      %v557 = vunpack.c.l.b16 %v461
      %v558 = vunpack.c.l.b16 %v462
      %v559 = vunpack.c.l.b16 %v463
      %v560 = vunpack.c.l.b16 %v464
      %v561 = vunpack.c.l.b16 %v465
      %v562 = vunpack.c.l.b16 %v466
      %v563 = vunpack.c.l.b16 %v467
      %v564 = vunpack.c.l.b16 %v468
      %v565 = vunpack.c.l.b16 %v469
      %v566 = vunpack.c.l.b16 %v470
      %v567 = vunpack.c.l.b16 %v471
      %v568 = vunpack.c.l.b16 %v472
      %v569 = vunpack.c.l.b16 %v473
      %v570 = vunpack.c.l.b16 %v474
      %v571 = vunpack.c.l.b16 %v475
      %v572 = vpack.c.b16 %v525, %v524
      %v573 = vpack.c.b16 %v527, %v526
      %v574 = vpack.c.b16 %v529, %v528
      %v575 = vpack.c.b16 %v531, %v530
      %v576 = vpack.c.b16 %v533, %v532
      %v577 = vpack.c.b16 %v535, %v534
      %v578 = vpack.c.b16 %v537, %v536
      %v579 = vpack.c.b16 %v539, %v538
      %v580 = vpack.c.b16 %v541, %v540
      %v581 = vpack.c.b16 %v543, %v542
      %v582 = vpack.c.b16 %v545, %v544
      %v583 = vpack.c.b16 %v547, %v546
      %v584 = vpack.c.b16 %v549, %v548
      %v585 = vpack.c.b16 %v551, %v550
      %v586 = vpack.c.b16 %v553, %v552
      %v587 = vpack.c.b16 %v555, %v554
      %v588 = vpack.c.b16 %v557, %v556
      %v589 = vpack.c.b16 %v559, %v558
      %v590 = vpack.c.b16 %v561, %v560
      %v591 = vpack.c.b16 %v563, %v562
      %v592 = vpack.c.b16 %v565, %v564
      %v593 = vpack.c.b16 %v567, %v566
      %v594 = vpack.c.b16 %v569, %v568
      %v595 = vpack.c.b16 %v571, %v570
      %620 = vmatprep.subr.bf16.mxu0 0
      %621 = vmatpush1.bf16.msra.mxu0 %v572
      %622 = vmatprep.subr.bf16.mxu0 0
      %623 = vmatpush1.bf16.msra.mxu0 %v573
      %624 = vmatprep.subr.bf16.mxu0 0
      %625 = vmatpush1.bf16.msra.mxu0 %v574
      %626 = vmatprep.subr.bf16.mxu0 0
      %627 = vmatpush1.bf16.msra.mxu0 %v575
      %628 = vmatprep.subr.bf16.mxu0 0
      %629 = vmatpush1.bf16.msra.mxu0 %v576
      %630 = vmatprep.subr.bf16.mxu0 0
      %631 = vmatpush1.bf16.msra.mxu0 %v577
      %632 = vmatprep.subr.bf16.mxu0 0
      %633 = vmatpush1.bf16.msra.mxu0 %v578
      %634 = vmatprep.subr.bf16.mxu0 0
      %635 = vmatpush1.bf16.msra.mxu0 %v579
      %636 = vmatprep.subr.bf16.mxu0 0
      %637 = vmatpush1.bf16.msra.mxu0 %v580
      %638 = vmatprep.subr.bf16.mxu0 0
      %639 = vmatpush1.bf16.msra.mxu0 %v581
      %640 = vmatprep.subr.bf16.mxu0 0
      %641 = vmatpush1.bf16.msra.mxu0 %v582
      %642 = vmatprep.subr.bf16.mxu0 0
      %643 = vmatpush1.bf16.msra.mxu0 %v583
      %644 = vmatprep.subr.bf16.mxu0 0
      %645 = vmatpush1.bf16.msra.mxu0 %v584
      %646 = vmatprep.subr.bf16.mxu0 0
      %647 = vmatpush1.bf16.msra.mxu0 %v585
      %648 = vmatprep.subr.bf16.mxu0 0
      %649 = vmatpush1.bf16.msra.mxu0 %v586
      %650 = vmatprep.subr.bf16.mxu0 0
      %651 = vmatpush1.bf16.msra.mxu0 %v587
      %652 = vmatprep.mubr.bf16.mxu0 %v404
      %653 = vmatmul.mubr.bf16.gmra.mrb[0].mxu0 %v403
      %v654 = vpop.f32.mrb[0].mxu0
      %v655 = vadd.f32 0.0, %v654
      %v656 = vpop.f32.mrb[0].mxu0
      %v657 = vpop.f32.mrb[0].mxu0
      %v658 = vadd.f32 0.0, %v657
      %v659 = vpop.f32.mrb[0].mxu0
      %660 = vmatprep.mubr.bf16.mxu0 %v407
      %661 = vmatmul.mubr.bf16.gmra.mrb[0].mxu0 %v406
      %v662 = vpop.f32.mrb[0].mxu0
      %v663 = vadd.f32 0.0, %v662
      %v664 = vpop.f32.mrb[0].mxu0
      %v665 = vpop.f32.mrb[0].mxu0
      %v666 = vadd.f32 0.0, %v665
      %v667 = vpop.f32.mrb[0].mxu0
      %668 = vmatprep.mubr.bf16.mxu0 %v410
      %669 = vmatmul.mubr.bf16.gmra.mrb[0].mxu0 %v409
      %v670 = vpop.f32.mrb[0].mxu0
      %v671 = vadd.f32 0.0, %v670
      %v672 = vpop.f32.mrb[0].mxu0
      %v673 = vpop.f32.mrb[0].mxu0
      %v674 = vadd.f32 0.0, %v673
      %v675 = vpop.f32.mrb[0].mxu0
      %676 = vmatprep.mubr.bf16.mxu0 %v413
      %677 = vmatmul.mubr.bf16.gmra.mrb[0].mxu0 %v412
      %v678 = vpop.f32.mrb[0].mxu0
      %v679 = vadd.f32 0.0, %v678
      %v680 = vpop.f32.mrb[0].mxu0
      %v681 = vpop.f32.mrb[0].mxu0
      %v682 = vadd.f32 0.0, %v681
      %v683 = vpop.f32.mrb[0].mxu0
      %684 = vmatprep.mubr.bf16.mxu0 %v416
      %685 = vmatmul.mubr.bf16.gmra.mrb[0].mxu0 %v415
      %v686 = vpop.f32.mrb[0].mxu0
      %v687 = vadd.f32 0.0, %v686
      %v688 = vpop.f32.mrb[0].mxu0
      %v689 = vpop.f32.mrb[0].mxu0
      %v690 = vadd.f32 0.0, %v689
      %v691 = vpop.f32.mrb[0].mxu0
      %692 = vmatprep.mubr.bf16.mxu0 %v419
      %693 = vmatmul.mubr.bf16.gmra.mrb[0].mxu0 %v418
      %v694 = vpop.f32.mrb[0].mxu0
      %v695 = vadd.f32 0.0, %v694
      %v696 = vpop.f32.mrb[0].mxu0
      %v697 = vpop.f32.mrb[0].mxu0
      %v698 = vadd.f32 0.0, %v697
      %v699 = vpop.f32.mrb[0].mxu0
      %700 = vmatprep.mubr.bf16.mxu0 %v422
      %701 = vmatmul.mubr.bf16.gmra.mrb[0].mxu0 %v421
      %v702 = vpop.f32.mrb[0].mxu0
      %v703 = vadd.f32 0.0, %v702
      %v704 = vpop.f32.mrb[0].mxu0
      %v705 = vpop.f32.mrb[0].mxu0
      %v706 = vadd.f32 0.0, %v705
      %v707 = vpop.f32.mrb[0].mxu0
      %708 = vmatprep.mubr.bf16.mxu0 %v425
      %709 = vmatmul.mubr.bf16.gmra.mrb[0].mxu0 %v424
      %v710 = vpop.f32.mrb[0].mxu0
      %v711 = vadd.f32 0.0, %v710
      %v712 = vpop.f32.mrb[0].mxu0
      %v713 = vpop.f32.mrb[0].mxu0
      %v714 = vadd.f32 0.0, %v713
      %v715 = vpop.f32.mrb[0].mxu0
      %716 = vdwg.mxu0
      %717 = vmatprep.subr.bf16.mxu0 0
      %718 = vmatpush1.bf16.msra.mxu0 %v588
      %719 = vmatprep.subr.bf16.mxu0 0
      %720 = vmatpush1.bf16.msra.mxu0 %v589
      %721 = vmatprep.subr.bf16.mxu0 0
      %722 = vmatpush1.bf16.msra.mxu0 %v590
      %723 = vmatprep.subr.bf16.mxu0 0
      %724 = vmatpush1.bf16.msra.mxu0 %v591
      %725 = vmatprep.subr.bf16.mxu0 0
      %726 = vmatpush1.bf16.msra.mxu0 %v592
      %727 = vmatprep.subr.bf16.mxu0 0
      %728 = vmatpush1.bf16.msra.mxu0 %v593
      %729 = vmatprep.subr.bf16.mxu0 0
      %730 = vmatpush1.bf16.msra.mxu0 %v594
      %731 = vmatprep.subr.bf16.mxu0 0
      %732 = vmatpush1.bf16.msra.mxu0 %v595
      %733 = vmatprep.subr.bf16.mxu0 0
      %734 = vmatpush1.bf16.msra.mxu0 0
      %735 = vmatprep.subr.bf16.mxu0 0
      %736 = vmatpush1.bf16.msra.mxu0 0
      %737 = vmatprep.subr.bf16.mxu0 0
      %738 = vmatpush1.bf16.msra.mxu0 0
      %739 = vmatprep.subr.bf16.mxu0 0
      %740 = vmatpush1.bf16.msra.mxu0 0
      %741 = vmatprep.subr.bf16.mxu0 0
      %742 = vmatpush1.bf16.msra.mxu0 0
      %743 = vmatprep.subr.bf16.mxu0 0
      %744 = vmatpush1.bf16.msra.mxu0 0
      %745 = vmatprep.subr.bf16.mxu0 0
      %746 = vmatpush1.bf16.msra.mxu0 0
      %747 = vmatprep.subr.bf16.mxu0 0
      %748 = vmatpush1.bf16.msra.mxu0 0
      %749 = vmatprep.mubr.bf16.mxu0 0
      %750 = vmatmul.mubr.bf16.gmra.mrb[0].mxu0 %v405
      %v751 = vpop.f32.mrb[0].mxu0
      %v752 = vadd.f32 %v655, %v751
      %v753 = vpop.f32.mrb[0].mxu0
      %v754 = vpop.f32.mrb[0].mxu0
      %v755 = vadd.f32 %v658, %v754
      %v756 = vpop.f32.mrb[0].mxu0
      %757 = vmatprep.mubr.bf16.mxu0 0
      %758 = vmatmul.mubr.bf16.gmra.mrb[0].mxu0 %v408
      %v759 = vpop.f32.mrb[0].mxu0
      %v760 = vadd.f32 %v663, %v759
      %v761 = vpop.f32.mrb[0].mxu0
      %v762 = vpop.f32.mrb[0].mxu0
      %v763 = vadd.f32 %v666, %v762
      %v764 = vpop.f32.mrb[0].mxu0
      %765 = vmatprep.mubr.bf16.mxu0 0
      %766 = vmatmul.mubr.bf16.gmra.mrb[0].mxu0 %v411
      %v767 = vpop.f32.mrb[0].mxu0
      %v768 = vadd.f32 %v671, %v767
      %v769 = vpop.f32.mrb[0].mxu0
      %v770 = vpop.f32.mrb[0].mxu0
      %v771 = vadd.f32 %v674, %v770
      %v772 = vpop.f32.mrb[0].mxu0
      %773 = vmatprep.mubr.bf16.mxu0 0
      %774 = vmatmul.mubr.bf16.gmra.mrb[0].mxu0 %v414
      %v775 = vpop.f32.mrb[0].mxu0
      %v776 = vadd.f32 %v679, %v775
      %v777 = vpop.f32.mrb[0].mxu0
      %v778 = vpop.f32.mrb[0].mxu0
      %v779 = vadd.f32 %v682, %v778
      %v780 = vpop.f32.mrb[0].mxu0
      %781 = vmatprep.mubr.bf16.mxu0 0
      %782 = vmatmul.mubr.bf16.gmra.mrb[0].mxu0 %v417
      %v783 = vpop.f32.mrb[0].mxu0
      %v784 = vadd.f32 %v687, %v783
      %v785 = vpop.f32.mrb[0].mxu0
      %v786 = vpop.f32.mrb[0].mxu0
      %v787 = vadd.f32 %v690, %v786
      %v788 = vpop.f32.mrb[0].mxu0
      %789 = vmatprep.mubr.bf16.mxu0 0
      %790 = vmatmul.mubr.bf16.gmra.mrb[0].mxu0 %v420
      %v791 = vpop.f32.mrb[0].mxu0
      %v792 = vadd.f32 %v695, %v791
      %v793 = vpop.f32.mrb[0].mxu0
      %v794 = vpop.f32.mrb[0].mxu0
      %v795 = vadd.f32 %v698, %v794
      %v796 = vpop.f32.mrb[0].mxu0
      %797 = vmatprep.mubr.bf16.mxu0 0
      %798 = vmatmul.mubr.bf16.gmra.mrb[0].mxu0 %v423
      %v799 = vpop.f32.mrb[0].mxu0
      %v800 = vadd.f32 %v703, %v799
      %v801 = vpop.f32.mrb[0].mxu0
      %v802 = vpop.f32.mrb[0].mxu0
      %v803 = vadd.f32 %v706, %v802
      %v804 = vpop.f32.mrb[0].mxu0
      %805 = vmatprep.mubr.bf16.mxu0 0
      %806 = vmatmul.mubr.bf16.gmra.mrb[0].mxu0 %v426
      %v807 = vpop.f32.mrb[0].mxu0
      %v808 = vadd.f32 %v711, %v807
      %v809 = vpop.f32.mrb[0].mxu0
      %v810 = vpop.f32.mrb[0].mxu0
      %v811 = vadd.f32 %v714, %v810
      %v812 = vpop.f32.mrb[0].mxu0
      %813 = vdwg.mxu0
      %v862 = vunpack.c.l.b16 %v351
      %v863 = vunpack.c.l.b16 %v352
      %v864 = vunpack.c.l.b16 %v353
      %v865 = vunpack.c.l.b16 %v354
      %v866 = vunpack.c.l.b16 %v355
      %v867 = vunpack.c.l.b16 %v356
      %v868 = vunpack.c.l.b16 %v357
      %v869 = vunpack.c.l.b16 %v358
      %v870 = vunpack.c.l.b16 %v359
      %v871 = vunpack.c.l.b16 %v360
      %v872 = vunpack.c.l.b16 %v361
      %v873 = vunpack.c.l.b16 %v362
      %v874 = vunpack.c.l.b16 %v363
      %v875 = vunpack.c.l.b16 %v364
      %v876 = vunpack.c.l.b16 %v365
      %v877 = vunpack.c.l.b16 %v366
      %v878 = vunpack.c.l.b16 %v367
      %v879 = vunpack.c.l.b16 %v368
      %v880 = vunpack.c.l.b16 %v369
      %v881 = vunpack.c.l.b16 %v370
      %v882 = vunpack.c.l.b16 %v371
      %v883 = vunpack.c.l.b16 %v372
      %v884 = vunpack.c.l.b16 %v373
      %v885 = vunpack.c.l.b16 %v374
      %v886 = vunpack.c.l.b16 %v375
      %v887 = vunpack.c.l.b16 %v376
      %v888 = vunpack.c.l.b16 %v377
      %v889 = vunpack.c.l.b16 %v378
      %v890 = vunpack.c.l.b16 %v379
      %v891 = vunpack.c.l.b16 %v380
      %v892 = vunpack.c.l.b16 %v381
      %v893 = vunpack.c.l.b16 %v382
      %v894 = vunpack.c.l.b16 %v383
      %v895 = vunpack.c.l.b16 %v384
      %v896 = vunpack.c.l.b16 %v385
      %v897 = vunpack.c.l.b16 %v386
      %v898 = vunpack.c.l.b16 %v387
      %v899 = vunpack.c.l.b16 %v388
      %v900 = vunpack.c.l.b16 %v389
      %v901 = vunpack.c.l.b16 %v390
      %v902 = vunpack.c.l.b16 %v391
      %v903 = vunpack.c.l.b16 %v392
      %v904 = vunpack.c.l.b16 %v393
      %v905 = vunpack.c.l.b16 %v394
      %v906 = vunpack.c.l.b16 %v395
      %v907 = vunpack.c.l.b16 %v396
      %v908 = vunpack.c.l.b16 %v397
      %v909 = vunpack.c.l.b16 %v398
      %v910 = vpack.c.b16 %v863, %v862
      %v911 = vpack.c.b16 %v865, %v864
      %v912 = vpack.c.b16 %v867, %v866
      %v913 = vpack.c.b16 %v869, %v868
      %v914 = vpack.c.b16 %v871, %v870
      %v915 = vpack.c.b16 %v873, %v872
      %v916 = vpack.c.b16 %v875, %v874
      %v917 = vpack.c.b16 %v877, %v876
      %v918 = vpack.c.b16 %v879, %v878
      %v919 = vpack.c.b16 %v881, %v880
      %v920 = vpack.c.b16 %v883, %v882
      %v921 = vpack.c.b16 %v885, %v884
      %v922 = vpack.c.b16 %v887, %v886
      %v923 = vpack.c.b16 %v889, %v888
      %v924 = vpack.c.b16 %v891, %v890
      %v925 = vpack.c.b16 %v893, %v892
      %v926 = vpack.c.b16 %v895, %v894
      %v927 = vpack.c.b16 %v897, %v896
      %v928 = vpack.c.b16 %v899, %v898
      %v929 = vpack.c.b16 %v901, %v900
      %v930 = vpack.c.b16 %v903, %v902
      %v931 = vpack.c.b16 %v905, %v904
      %v932 = vpack.c.b16 %v907, %v906
      %v933 = vpack.c.b16 %v909, %v908
      %958 = vmatprep.subr.bf16.mxu0 0
      %959 = vmatpush1.bf16.msra.mxu0 %v910
      %960 = vmatprep.subr.bf16.mxu0 0
      %961 = vmatpush1.bf16.msra.mxu0 %v911
      %962 = vmatprep.subr.bf16.mxu0 0
      %963 = vmatpush1.bf16.msra.mxu0 %v912
      %964 = vmatprep.subr.bf16.mxu0 0
      %965 = vmatpush1.bf16.msra.mxu0 %v913
      %966 = vmatprep.subr.bf16.mxu0 0
      %967 = vmatpush1.bf16.msra.mxu0 %v914
      %968 = vmatprep.subr.bf16.mxu0 0
      %969 = vmatpush1.bf16.msra.mxu0 %v915
      %970 = vmatprep.subr.bf16.mxu0 0
      %971 = vmatpush1.bf16.msra.mxu0 %v916
      %972 = vmatprep.subr.bf16.mxu0 0
      %973 = vmatpush1.bf16.msra.mxu0 %v917
      %974 = vmatprep.subr.bf16.mxu0 0
      %975 = vmatpush1.bf16.msra.mxu0 %v918
      %976 = vmatprep.subr.bf16.mxu0 0
      %977 = vmatpush1.bf16.msra.mxu0 %v919
      %978 = vmatprep.subr.bf16.mxu0 0
      %979 = vmatpush1.bf16.msra.mxu0 %v920
      %980 = vmatprep.subr.bf16.mxu0 0
      %981 = vmatpush1.bf16.msra.mxu0 %v921
      %982 = vmatprep.subr.bf16.mxu0 0
      %983 = vmatpush1.bf16.msra.mxu0 %v922
      %984 = vmatprep.subr.bf16.mxu0 0
      %985 = vmatpush1.bf16.msra.mxu0 %v923
      %986 = vmatprep.subr.bf16.mxu0 0
      %987 = vmatpush1.bf16.msra.mxu0 %v924
      %988 = vmatprep.subr.bf16.mxu0 0
      %989 = vmatpush1.bf16.msra.mxu0 %v925
      %990 = vmatprep.mubr.bf16.mxu0 %v328
      %991 = vmatmul.mubr.bf16.gmra.mrb[0].mxu0 %v327
      %v992 = vpop.f32.mrb[0].mxu0
      %v993 = vadd.f32 %v752, %v992
      %v994 = vpop.f32.mrb[0].mxu0
      %v995 = vpop.f32.mrb[0].mxu0
      %v996 = vadd.f32 %v755, %v995
      %v997 = vpop.f32.mrb[0].mxu0
      %998 = vmatprep.mubr.bf16.mxu0 %v331
      %999 = vmatmul.mubr.bf16.gmra.mrb[0].mxu0 %v330
      %v1000 = vpop.f32.mrb[0].mxu0
      %v1001 = vadd.f32 %v760, %v1000
      %v1002 = vpop.f32.mrb[0].mxu0
      %v1003 = vpop.f32.mrb[0].mxu0
      %v1004 = vadd.f32 %v763, %v1003
      %v1005 = vpop.f32.mrb[0].mxu0
      %1006 = vmatprep.mubr.bf16.mxu0 %v334
      %1007 = vmatmul.mubr.bf16.gmra.mrb[0].mxu0 %v333
      %v1008 = vpop.f32.mrb[0].mxu0
      %v1009 = vadd.f32 %v768, %v1008
      %v1010 = vpop.f32.mrb[0].mxu0
      %v1011 = vpop.f32.mrb[0].mxu0
      %v1012 = vadd.f32 %v771, %v1011
      %v1013 = vpop.f32.mrb[0].mxu0
      %1014 = vmatprep.mubr.bf16.mxu0 %v337
      %1015 = vmatmul.mubr.bf16.gmra.mrb[0].mxu0 %v336
      %v1016 = vpop.f32.mrb[0].mxu0
      %v1017 = vadd.f32 %v776, %v1016
      %v1018 = vpop.f32.mrb[0].mxu0
      %v1019 = vpop.f32.mrb[0].mxu0
      %v1020 = vadd.f32 %v779, %v1019
      %v1021 = vpop.f32.mrb[0].mxu0
      %1022 = vmatprep.mubr.bf16.mxu0 %v340
      %1023 = vmatmul.mubr.bf16.gmra.mrb[0].mxu0 %v339
      %v1024 = vpop.f32.mrb[0].mxu0
      %v1025 = vadd.f32 %v784, %v1024
      %v1026 = vpop.f32.mrb[0].mxu0
      %v1027 = vpop.f32.mrb[0].mxu0
      %v1028 = vadd.f32 %v787, %v1027
      %v1029 = vpop.f32.mrb[0].mxu0
      %1030 = vmatprep.mubr.bf16.mxu0 %v343
      %1031 = vmatmul.mubr.bf16.gmra.mrb[0].mxu0 %v342
      %v1032 = vpop.f32.mrb[0].mxu0
      %v1033 = vadd.f32 %v792, %v1032
      %v1034 = vpop.f32.mrb[0].mxu0
      %v1035 = vpop.f32.mrb[0].mxu0
      %v1036 = vadd.f32 %v795, %v1035
      %v1037 = vpop.f32.mrb[0].mxu0
      %1038 = vmatprep.mubr.bf16.mxu0 %v346
      %1039 = vmatmul.mubr.bf16.gmra.mrb[0].mxu0 %v345
      %v1040 = vpop.f32.mrb[0].mxu0
      %v1041 = vadd.f32 %v800, %v1040
      %v1042 = vpop.f32.mrb[0].mxu0
      %v1043 = vpop.f32.mrb[0].mxu0
      %v1044 = vadd.f32 %v803, %v1043
      %v1045 = vpop.f32.mrb[0].mxu0
      %1046 = vmatprep.mubr.bf16.mxu0 %v349
      %1047 = vmatmul.mubr.bf16.gmra.mrb[0].mxu0 %v348
      %v1048 = vpop.f32.mrb[0].mxu0
      %v1049 = vadd.f32 %v808, %v1048
      %v1050 = vpop.f32.mrb[0].mxu0
      %v1051 = vpop.f32.mrb[0].mxu0
      %v1052 = vadd.f32 %v811, %v1051
      %v1053 = vpop.f32.mrb[0].mxu0
      %1054 = vdwg.mxu0
      %1055 = vmatprep.subr.bf16.mxu0 0
      %1056 = vmatpush1.bf16.msra.mxu0 %v926
      %1057 = vmatprep.subr.bf16.mxu0 0
      %1058 = vmatpush1.bf16.msra.mxu0 %v927
      %1059 = vmatprep.subr.bf16.mxu0 0
      %1060 = vmatpush1.bf16.msra.mxu0 %v928
      %1061 = vmatprep.subr.bf16.mxu0 0
      %1062 = vmatpush1.bf16.msra.mxu0 %v929
      %1063 = vmatprep.subr.bf16.mxu0 0
      %1064 = vmatpush1.bf16.msra.mxu0 %v930
      %1065 = vmatprep.subr.bf16.mxu0 0
      %1066 = vmatpush1.bf16.msra.mxu0 %v931
      %1067 = vmatprep.subr.bf16.mxu0 0
      %1068 = vmatpush1.bf16.msra.mxu0 %v932
      %1069 = vmatprep.subr.bf16.mxu0 0
      %1070 = vmatpush1.bf16.msra.mxu0 %v933
      %1071 = vmatprep.subr.bf16.mxu0 0
      %1072 = vmatpush1.bf16.msra.mxu0 0
      %1073 = vmatprep.subr.bf16.mxu0 0
      %1074 = vmatpush1.bf16.msra.mxu0 0
      %1075 = vmatprep.subr.bf16.mxu0 0
      %1076 = vmatpush1.bf16.msra.mxu0 0
      %1077 = vmatprep.subr.bf16.mxu0 0
      %1078 = vmatpush1.bf16.msra.mxu0 0
      %1079 = vmatprep.subr.bf16.mxu0 0
      %1080 = vmatpush1.bf16.msra.mxu0 0
      %1081 = vmatprep.subr.bf16.mxu0 0
      %1082 = vmatpush1.bf16.msra.mxu0 0
      %1083 = vmatprep.subr.bf16.mxu0 0
      %1084 = vmatpush1.bf16.msra.mxu0 0
      %1085 = vmatprep.subr.bf16.mxu0 0
      %1086 = vmatpush1.bf16.msra.mxu0 0
      %1087 = vmatprep.mubr.bf16.mxu0 0
      %1088 = vmatmul.mubr.bf16.gmra.mrb[0].mxu0 %v329
      %v1089 = vpop.f32.mrb[0].mxu0
      %v1090 = vadd.f32 %v993, %v1089
      %v1091 = vpop.f32.mrb[0].mxu0
      %v1092 = vpop.f32.mrb[0].mxu0
      %v1093 = vadd.f32 %v996, %v1092
      %v1094 = vpop.f32.mrb[0].mxu0
      %1095 = vmatprep.mubr.bf16.mxu0 0
      %1096 = vmatmul.mubr.bf16.gmra.mrb[0].mxu0 %v332
      %v1097 = vpop.f32.mrb[0].mxu0
      %v1098 = vadd.f32 %v1001, %v1097
      %v1099 = vpop.f32.mrb[0].mxu0
      %v1100 = vpop.f32.mrb[0].mxu0
      %v1101 = vadd.f32 %v1004, %v1100
      %v1102 = vpop.f32.mrb[0].mxu0
      %1103 = vmatprep.mubr.bf16.mxu0 0
      %1104 = vmatmul.mubr.bf16.gmra.mrb[0].mxu0 %v335
      %v1105 = vpop.f32.mrb[0].mxu0
      %v1106 = vadd.f32 %v1009, %v1105
      %v1107 = vpop.f32.mrb[0].mxu0
      %v1108 = vpop.f32.mrb[0].mxu0
      %v1109 = vadd.f32 %v1012, %v1108
      %v1110 = vpop.f32.mrb[0].mxu0
      %1111 = vmatprep.mubr.bf16.mxu0 0
      %1112 = vmatmul.mubr.bf16.gmra.mrb[0].mxu0 %v338
      %v1113 = vpop.f32.mrb[0].mxu0
      %v1114 = vadd.f32 %v1017, %v1113
      %v1115 = vpop.f32.mrb[0].mxu0
      %v1116 = vpop.f32.mrb[0].mxu0
      %v1117 = vadd.f32 %v1020, %v1116
      %v1118 = vpop.f32.mrb[0].mxu0
      %1119 = vmatprep.mubr.bf16.mxu0 0
      %1120 = vmatmul.mubr.bf16.gmra.mrb[0].mxu0 %v341
      %v1121 = vpop.f32.mrb[0].mxu0
      %v1122 = vadd.f32 %v1025, %v1121
      %v1123 = vpop.f32.mrb[0].mxu0
      %v1124 = vpop.f32.mrb[0].mxu0
      %v1125 = vadd.f32 %v1028, %v1124
      %v1126 = vpop.f32.mrb[0].mxu0
      %1127 = vmatprep.mubr.bf16.mxu0 0
      %1128 = vmatmul.mubr.bf16.gmra.mrb[0].mxu0 %v344
      %v1129 = vpop.f32.mrb[0].mxu0
      %v1130 = vadd.f32 %v1033, %v1129
      %v1131 = vpop.f32.mrb[0].mxu0
      %v1132 = vpop.f32.mrb[0].mxu0
      %v1133 = vadd.f32 %v1036, %v1132
      %v1134 = vpop.f32.mrb[0].mxu0
      %1135 = vmatprep.mubr.bf16.mxu0 0
      %1136 = vmatmul.mubr.bf16.gmra.mrb[0].mxu0 %v347
      %v1137 = vpop.f32.mrb[0].mxu0
      %v1138 = vadd.f32 %v1041, %v1137
      %v1139 = vpop.f32.mrb[0].mxu0
      %v1140 = vpop.f32.mrb[0].mxu0
      %v1141 = vadd.f32 %v1044, %v1140
      %v1142 = vpop.f32.mrb[0].mxu0
      %1143 = vmatprep.mubr.bf16.mxu0 0
      %1144 = vmatmul.mubr.bf16.gmra.mrb[0].mxu0 %v350
      %v1145 = vpop.f32.mrb[0].mxu0
      %v1146 = vadd.f32 %v1049, %v1145
      %v1147 = vpop.f32.mrb[0].mxu0
      %v1148 = vpop.f32.mrb[0].mxu0
      %v1149 = vadd.f32 %v1052, %v1148
      %v1150 = vpop.f32.mrb[0].mxu0
      %1151 = vdwg.mxu0
      %s1152 = sadd.s32 %s323, 2
      %s1153 = smul.u32 %s1152, 3
      %s1154 = smul.addr %s1153, 8
      %s1155 = scalar_lea.vmem [#allocation2], %s1154
      %v1156 = vld [vmem:[%s1155] sm:$0xff]
      %v1157 = vld [vmem:[%s1155 + $0x8] sm:$0xff]
      %v1158 = vld [vmem:[%s1155 + $0x10] sm:$0xff]
      %v1159 = vld [vmem:[%s1155 + $0x18] sm:$0xff]
      %v1160 = vld [vmem:[%s1155 + $0x20] sm:$0xff]
      %v1161 = vld [vmem:[%s1155 + $0x28] sm:$0xff]
      %v1162 = vld [vmem:[%s1155 + $0x30] sm:$0xff]
      %v1163 = vld [vmem:[%s1155 + $0x38] sm:$0xff]
      %v1164 = vld [vmem:[%s1155 + $0x40] sm:$0xff]
      %v1165 = vld [vmem:[%s1155 + $0x48] sm:$0xff]
      %v1166 = vld [vmem:[%s1155 + $0x50] sm:$0xff]
      %v1167 = vld [vmem:[%s1155 + $0x58] sm:$0xff]
      %v1168 = vld [vmem:[%s1155 + $0x60] sm:$0xff]
      %v1169 = vld [vmem:[%s1155 + $0x68] sm:$0xff]
      %v1170 = vld [vmem:[%s1155 + $0x70] sm:$0xff]
      %v1171 = vld [vmem:[%s1155 + $0x78] sm:$0xff]
      %v1172 = vld [vmem:[%s1155 + $0x80] sm:$0xff]
      %v1173 = vld [vmem:[%s1155 + $0x88] sm:$0xff]
      %v1174 = vld [vmem:[%s1155 + $0x90] sm:$0xff]
      %v1175 = vld [vmem:[%s1155 + $0x98] sm:$0xff]
      %v1176 = vld [vmem:[%s1155 + $0xa0] sm:$0xff]
      %v1177 = vld [vmem:[%s1155 + $0xa8] sm:$0xff]
      %v1178 = vld [vmem:[%s1155 + $0xb0] sm:$0xff]
      %v1179 = vld [vmem:[%s1155 + $0xb8] sm:$0xff]
      %s1180 = scalar_lea.vmem %s3, 384
      %v1181 = vld [vmem:[%s1180] sm:$0xf]
      %v1182 = vld [vmem:[%s1180 + $0x4] sm:$0xf]
      %v1183 = vld [vmem:[%s1180 + $0x8] sm:$0xf]
      %v1184 = vld [vmem:[%s1180 + $0xc] sm:$0xf]
      %v1185 = vld [vmem:[%s1180 + $0x10] sm:$0xf]
      %v1186 = vld [vmem:[%s1180 + $0x14] sm:$0xf]
      %v1187 = vld [vmem:[%s1180 + $0x18] sm:$0xf]
      %v1188 = vld [vmem:[%s1180 + $0x1c] sm:$0xf]
      %v1189 = vld [vmem:[%s1180 + $0x20] sm:$0xf]
      %v1190 = vld [vmem:[%s1180 + $0x24] sm:$0xf]
      %v1191 = vld [vmem:[%s1180 + $0x28] sm:$0xf]
      %v1192 = vld [vmem:[%s1180 + $0x2c] sm:$0xf]
      %v1193 = vld [vmem:[%s1180 + $0x30] sm:$0xf]
      %v1194 = vld [vmem:[%s1180 + $0x34] sm:$0xf]
      %v1195 = vld [vmem:[%s1180 + $0x38] sm:$0xf]
      %v1196 = vld [vmem:[%s1180 + $0x3c] sm:$0xf]
      %v1197 = vld [vmem:[%s1180 + $0x40] sm:$0xf]
      %v1198 = vld [vmem:[%s1180 + $0x44] sm:$0xf]
      %v1199 = vld [vmem:[%s1180 + $0x48] sm:$0xf]
      %v1200 = vld [vmem:[%s1180 + $0x4c] sm:$0xf]
      %v1201 = vld [vmem:[%s1180 + $0x50] sm:$0xf]
      %v1202 = vld [vmem:[%s1180 + $0x54] sm:$0xf]
      %v1203 = vld [vmem:[%s1180 + $0x58] sm:$0xf]
      %v1204 = vld [vmem:[%s1180 + $0x5c] sm:$0xf]
      %v1205 = vld [vmem:[%s1180 + $0x60] sm:$0xf]
      %v1206 = vld [vmem:[%s1180 + $0x64] sm:$0xf]
      %v1207 = vld [vmem:[%s1180 + $0x68] sm:$0xf]
      %v1208 = vld [vmem:[%s1180 + $0x6c] sm:$0xf]
      %v1209 = vld [vmem:[%s1180 + $0x70] sm:$0xf]
      %v1210 = vld [vmem:[%s1180 + $0x74] sm:$0xf]
      %v1211 = vld [vmem:[%s1180 + $0x78] sm:$0xf]
      %v1212 = vld [vmem:[%s1180 + $0x7c] sm:$0xf]
      %v1213 = vld [vmem:[%s1180 + $0x80] sm:$0xf]
      %v1214 = vld [vmem:[%s1180 + $0x84] sm:$0xf]
      %v1215 = vld [vmem:[%s1180 + $0x88] sm:$0xf]
      %v1216 = vld [vmem:[%s1180 + $0x8c] sm:$0xf]
      %v1217 = vld [vmem:[%s1180 + $0x90] sm:$0xf]
      %v1218 = vld [vmem:[%s1180 + $0x94] sm:$0xf]
      %v1219 = vld [vmem:[%s1180 + $0x98] sm:$0xf]
      %v1220 = vld [vmem:[%s1180 + $0x9c] sm:$0xf]
      %v1221 = vld [vmem:[%s1180 + $0xa0] sm:$0xf]
      %v1222 = vld [vmem:[%s1180 + $0xa4] sm:$0xf]
      %v1223 = vld [vmem:[%s1180 + $0xa8] sm:$0xf]
      %v1224 = vld [vmem:[%s1180 + $0xac] sm:$0xf]
      %v1225 = vld [vmem:[%s1180 + $0xb0] sm:$0xf]
      %v1226 = vld [vmem:[%s1180 + $0xb4] sm:$0xf]
      %v1227 = vld [vmem:[%s1180 + $0xb8] sm:$0xf]
      %v1228 = vld [vmem:[%s1180 + $0xbc] sm:$0xf]
      %v1277 = vunpack.c.l.b16 %v1181
      %v1278 = vunpack.c.l.b16 %v1182
      %v1279 = vunpack.c.l.b16 %v1183
      %v1280 = vunpack.c.l.b16 %v1184
      %v1281 = vunpack.c.l.b16 %v1185
      %v1282 = vunpack.c.l.b16 %v1186
      %v1283 = vunpack.c.l.b16 %v1187
      %v1284 = vunpack.c.l.b16 %v1188
      %v1285 = vunpack.c.l.b16 %v1189
      %v1286 = vunpack.c.l.b16 %v1190
      %v1287 = vunpack.c.l.b16 %v1191
      %v1288 = vunpack.c.l.b16 %v1192
      %v1289 = vunpack.c.l.b16 %v1193
      %v1290 = vunpack.c.l.b16 %v1194
      %v1291 = vunpack.c.l.b16 %v1195
      %v1292 = vunpack.c.l.b16 %v1196
      %v1293 = vunpack.c.l.b16 %v1197
      %v1294 = vunpack.c.l.b16 %v1198
      %v1295 = vunpack.c.l.b16 %v1199
      %v1296 = vunpack.c.l.b16 %v1200
      %v1297 = vunpack.c.l.b16 %v1201
      %v1298 = vunpack.c.l.b16 %v1202
      %v1299 = vunpack.c.l.b16 %v1203
      %v1300 = vunpack.c.l.b16 %v1204
      %v1301 = vunpack.c.l.b16 %v1205
      %v1302 = vunpack.c.l.b16 %v1206
      %v1303 = vunpack.c.l.b16 %v1207
      %v1304 = vunpack.c.l.b16 %v1208
      %v1305 = vunpack.c.l.b16 %v1209
      %v1306 = vunpack.c.l.b16 %v1210
      %v1307 = vunpack.c.l.b16 %v1211
      %v1308 = vunpack.c.l.b16 %v1212
      %v1309 = vunpack.c.l.b16 %v1213
      %v1310 = vunpack.c.l.b16 %v1214
      %v1311 = vunpack.c.l.b16 %v1215
      %v1312 = vunpack.c.l.b16 %v1216
      %v1313 = vunpack.c.l.b16 %v1217
      %v1314 = vunpack.c.l.b16 %v1218
      %v1315 = vunpack.c.l.b16 %v1219
      %v1316 = vunpack.c.l.b16 %v1220
      %v1317 = vunpack.c.l.b16 %v1221
      %v1318 = vunpack.c.l.b16 %v1222
      %v1319 = vunpack.c.l.b16 %v1223
      %v1320 = vunpack.c.l.b16 %v1224
      %v1321 = vunpack.c.l.b16 %v1225
      %v1322 = vunpack.c.l.b16 %v1226
      %v1323 = vunpack.c.l.b16 %v1227
      %v1324 = vunpack.c.l.b16 %v1228
      %v1325 = vpack.c.b16 %v1278, %v1277
      %v1326 = vpack.c.b16 %v1280, %v1279
      %v1327 = vpack.c.b16 %v1282, %v1281
      %v1328 = vpack.c.b16 %v1284, %v1283
      %v1329 = vpack.c.b16 %v1286, %v1285
      %v1330 = vpack.c.b16 %v1288, %v1287
      %v1331 = vpack.c.b16 %v1290, %v1289
      %v1332 = vpack.c.b16 %v1292, %v1291
      %v1333 = vpack.c.b16 %v1294, %v1293
      %v1334 = vpack.c.b16 %v1296, %v1295
      %v1335 = vpack.c.b16 %v1298, %v1297
      %v1336 = vpack.c.b16 %v1300, %v1299
      %v1337 = vpack.c.b16 %v1302, %v1301
      %v1338 = vpack.c.b16 %v1304, %v1303
      %v1339 = vpack.c.b16 %v1306, %v1305
      %v1340 = vpack.c.b16 %v1308, %v1307
      %v1341 = vpack.c.b16 %v1310, %v1309
      %v1342 = vpack.c.b16 %v1312, %v1311
      %v1343 = vpack.c.b16 %v1314, %v1313
      %v1344 = vpack.c.b16 %v1316, %v1315
      %v1345 = vpack.c.b16 %v1318, %v1317
      %v1346 = vpack.c.b16 %v1320, %v1319
      %v1347 = vpack.c.b16 %v1322, %v1321
      %v1348 = vpack.c.b16 %v1324, %v1323
      %1373 = vmatprep.subr.bf16.mxu0 0
      %1374 = vmatpush1.bf16.msra.mxu0 %v1325
      %1375 = vmatprep.subr.bf16.mxu0 0
      %1376 = vmatpush1.bf16.msra.mxu0 %v1326
      %1377 = vmatprep.subr.bf16.mxu0 0
      %1378 = vmatpush1.bf16.msra.mxu0 %v1327
      %1379 = vmatprep.subr.bf16.mxu0 0
      %1380 = vmatpush1.bf16.msra.mxu0 %v1328
      %1381 = vmatprep.subr.bf16.mxu0 0
      %1382 = vmatpush1.bf16.msra.mxu0 %v1329
      %1383 = vmatprep.subr.bf16.mxu0 0
      %1384 = vmatpush1.bf16.msra.mxu0 %v1330
      %1385 = vmatprep.subr.bf16.mxu0 0
      %1386 = vmatpush1.bf16.msra.mxu0 %v1331
      %1387 = vmatprep.subr.bf16.mxu0 0
      %1388 = vmatpush1.bf16.msra.mxu0 %v1332
      %1389 = vmatprep.subr.bf16.mxu0 0
      %1390 = vmatpush1.bf16.msra.mxu0 %v1333
      %1391 = vmatprep.subr.bf16.mxu0 0
      %1392 = vmatpush1.bf16.msra.mxu0 %v1334
      %1393 = vmatprep.subr.bf16.mxu0 0
      %1394 = vmatpush1.bf16.msra.mxu0 %v1335
      %1395 = vmatprep.subr.bf16.mxu0 0
      %1396 = vmatpush1.bf16.msra.mxu0 %v1336
      %1397 = vmatprep.subr.bf16.mxu0 0
      %1398 = vmatpush1.bf16.msra.mxu0 %v1337
      %1399 = vmatprep.subr.bf16.mxu0 0
      %1400 = vmatpush1.bf16.msra.mxu0 %v1338
      %1401 = vmatprep.subr.bf16.mxu0 0
      %1402 = vmatpush1.bf16.msra.mxu0 %v1339
      %1403 = vmatprep.subr.bf16.mxu0 0
      %1404 = vmatpush1.bf16.msra.mxu0 %v1340
      %1405 = vmatprep.mubr.bf16.mxu0 %v1157
      %1406 = vmatmul.mubr.bf16.gmra.mrb[0].mxu0 %v1156
      %v1407 = vpop.f32.mrb[0].mxu0
      %v1408 = vadd.f32 0.0, %v1407
      %v1409 = vpop.f32.mrb[0].mxu0
      %v1410 = vpop.f32.mrb[0].mxu0
      %v1411 = vadd.f32 0.0, %v1410
      %v1412 = vpop.f32.mrb[0].mxu0
      %1413 = vmatprep.mubr.bf16.mxu0 %v1160
      %1414 = vmatmul.mubr.bf16.gmra.mrb[0].mxu0 %v1159
      %v1415 = vpop.f32.mrb[0].mxu0
      %v1416 = vadd.f32 0.0, %v1415
      %v1417 = vpop.f32.mrb[0].mxu0
      %v1418 = vpop.f32.mrb[0].mxu0
      %v1419 = vadd.f32 0.0, %v1418
      %v1420 = vpop.f32.mrb[0].mxu0
      %1421 = vmatprep.mubr.bf16.mxu0 %v1163
      %1422 = vmatmul.mubr.bf16.gmra.mrb[0].mxu0 %v1162
      %v1423 = vpop.f32.mrb[0].mxu0
      %v1424 = vadd.f32 0.0, %v1423
      %v1425 = vpop.f32.mrb[0].mxu0
      %v1426 = vpop.f32.mrb[0].mxu0
      %v1427 = vadd.f32 0.0, %v1426
      %v1428 = vpop.f32.mrb[0].mxu0
      %1429 = vmatprep.mubr.bf16.mxu0 %v1166
      %1430 = vmatmul.mubr.bf16.gmra.mrb[0].mxu0 %v1165
      %v1431 = vpop.f32.mrb[0].mxu0
      %v1432 = vadd.f32 0.0, %v1431
      %v1433 = vpop.f32.mrb[0].mxu0
      %v1434 = vpop.f32.mrb[0].mxu0
      %v1435 = vadd.f32 0.0, %v1434
      %v1436 = vpop.f32.mrb[0].mxu0
      %1437 = vmatprep.mubr.bf16.mxu0 %v1169
      %1438 = vmatmul.mubr.bf16.gmra.mrb[0].mxu0 %v1168
      %v1439 = vpop.f32.mrb[0].mxu0
      %v1440 = vadd.f32 0.0, %v1439
      %v1441 = vpop.f32.mrb[0].mxu0
      %v1442 = vpop.f32.mrb[0].mxu0
      %v1443 = vadd.f32 0.0, %v1442
      %v1444 = vpop.f32.mrb[0].mxu0
      %1445 = vmatprep.mubr.bf16.mxu0 %v1172
      %1446 = vmatmul.mubr.bf16.gmra.mrb[0].mxu0 %v1171
      %v1447 = vpop.f32.mrb[0].mxu0
      %v1448 = vadd.f32 0.0, %v1447
      %v1449 = vpop.f32.mrb[0].mxu0
      %v1450 = vpop.f32.mrb[0].mxu0
      %v1451 = vadd.f32 0.0, %v1450
      %v1452 = vpop.f32.mrb[0].mxu0
      %1453 = vmatprep.mubr.bf16.mxu0 %v1175
      %1454 = vmatmul.mubr.bf16.gmra.mrb[0].mxu0 %v1174
      %v1455 = vpop.f32.mrb[0].mxu0
      %v1456 = vadd.f32 0.0, %v1455
      %v1457 = vpop.f32.mrb[0].mxu0
      %v1458 = vpop.f32.mrb[0].mxu0
      %v1459 = vadd.f32 0.0, %v1458
      %v1460 = vpop.f32.mrb[0].mxu0
      %1461 = vmatprep.mubr.bf16.mxu0 %v1178
      %1462 = vmatmul.mubr.bf16.gmra.mrb[0].mxu0 %v1177
      %v1463 = vpop.f32.mrb[0].mxu0
      %v1464 = vadd.f32 0.0, %v1463
      %v1465 = vpop.f32.mrb[0].mxu0
      %v1466 = vpop.f32.mrb[0].mxu0
      %v1467 = vadd.f32 0.0, %v1466
      %v1468 = vpop.f32.mrb[0].mxu0
      %1469 = vdwg.mxu0
      %1470 = vmatprep.subr.bf16.mxu0 0
      %1471 = vmatpush1.bf16.msra.mxu0 %v1341
      %1472 = vmatprep.subr.bf16.mxu0 0
      %1473 = vmatpush1.bf16.msra.mxu0 %v1342
      %1474 = vmatprep.subr.bf16.mxu0 0
      %1475 = vmatpush1.bf16.msra.mxu0 %v1343
      %1476 = vmatprep.subr.bf16.mxu0 0
      %1477 = vmatpush1.bf16.msra.mxu0 %v1344
      %1478 = vmatprep.subr.bf16.mxu0 0
      %1479 = vmatpush1.bf16.msra.mxu0 %v1345
      %1480 = vmatprep.subr.bf16.mxu0 0
      %1481 = vmatpush1.bf16.msra.mxu0 %v1346
      %1482 = vmatprep.subr.bf16.mxu0 0
      %1483 = vmatpush1.bf16.msra.mxu0 %v1347
      %1484 = vmatprep.subr.bf16.mxu0 0
      %1485 = vmatpush1.bf16.msra.mxu0 %v1348
      %1486 = vmatprep.subr.bf16.mxu0 0
      %1487 = vmatpush1.bf16.msra.mxu0 0
      %1488 = vmatprep.subr.bf16.mxu0 0
      %1489 = vmatpush1.bf16.msra.mxu0 0
      %1490 = vmatprep.subr.bf16.mxu0 0
      %1491 = vmatpush1.bf16.msra.mxu0 0
      %1492 = vmatprep.subr.bf16.mxu0 0
      %1493 = vmatpush1.bf16.msra.mxu0 0
      %1494 = vmatprep.subr.bf16.mxu0 0
      %1495 = vmatpush1.bf16.msra.mxu0 0
      %1496 = vmatprep.subr.bf16.mxu0 0
      %1497 = vmatpush1.bf16.msra.mxu0 0
      %1498 = vmatprep.subr.bf16.mxu0 0
      %1499 = vmatpush1.bf16.msra.mxu0 0
      %1500 = vmatprep.subr.bf16.mxu0 0
      %1501 = vmatpush1.bf16.msra.mxu0 0
      %1502 = vmatprep.mubr.bf16.mxu0 0
      %1503 = vmatmul.mubr.bf16.gmra.mrb[0].mxu0 %v1158
      %v1504 = vpop.f32.mrb[0].mxu0
      %v1505 = vadd.f32 %v1408, %v1504
      %v1506 = vpop.f32.mrb[0].mxu0
      %v1507 = vpop.f32.mrb[0].mxu0
      %v1508 = vadd.f32 %v1411, %v1507
      %v1509 = vpop.f32.mrb[0].mxu0
      %1510 = vmatprep.mubr.bf16.mxu0 0
      %1511 = vmatmul.mubr.bf16.gmra.mrb[0].mxu0 %v1161
      %v1512 = vpop.f32.mrb[0].mxu0
      %v1513 = vadd.f32 %v1416, %v1512
      %v1514 = vpop.f32.mrb[0].mxu0
      %v1515 = vpop.f32.mrb[0].mxu0
      %v1516 = vadd.f32 %v1419, %v1515
      %v1517 = vpop.f32.mrb[0].mxu0
      %1518 = vmatprep.mubr.bf16.mxu0 0
      %1519 = vmatmul.mubr.bf16.gmra.mrb[0].mxu0 %v1164
      %v1520 = vpop.f32.mrb[0].mxu0
      %v1521 = vadd.f32 %v1424, %v1520
      %v1522 = vpop.f32.mrb[0].mxu0
      %v1523 = vpop.f32.mrb[0].mxu0
      %v1524 = vadd.f32 %v1427, %v1523
      %v1525 = vpop.f32.mrb[0].mxu0
      %1526 = vmatprep.mubr.bf16.mxu0 0
      %1527 = vmatmul.mubr.bf16.gmra.mrb[0].mxu0 %v1167
      %v1528 = vpop.f32.mrb[0].mxu0
      %v1529 = vadd.f32 %v1432, %v1528
      %v1530 = vpop.f32.mrb[0].mxu0
      %v1531 = vpop.f32.mrb[0].mxu0
      %v1532 = vadd.f32 %v1435, %v1531
      %v1533 = vpop.f32.mrb[0].mxu0
      %1534 = vmatprep.mubr.bf16.mxu0 0
      %1535 = vmatmul.mubr.bf16.gmra.mrb[0].mxu0 %v1170
      %v1536 = vpop.f32.mrb[0].mxu0
      %v1537 = vadd.f32 %v1440, %v1536
      %v1538 = vpop.f32.mrb[0].mxu0
      %v1539 = vpop.f32.mrb[0].mxu0
      %v1540 = vadd.f32 %v1443, %v1539
      %v1541 = vpop.f32.mrb[0].mxu0
      %1542 = vmatprep.mubr.bf16.mxu0 0
      %1543 = vmatmul.mubr.bf16.gmra.mrb[0].mxu0 %v1173
      %v1544 = vpop.f32.mrb[0].mxu0
      %v1545 = vadd.f32 %v1448, %v1544
      %v1546 = vpop.f32.mrb[0].mxu0
      %v1547 = vpop.f32.mrb[0].mxu0
      %v1548 = vadd.f32 %v1451, %v1547
      %v1549 = vpop.f32.mrb[0].mxu0
      %1550 = vmatprep.mubr.bf16.mxu0 0
      %1551 = vmatmul.mubr.bf16.gmra.mrb[0].mxu0 %v1176
      %v1552 = vpop.f32.mrb[0].mxu0
      %v1553 = vadd.f32 %v1456, %v1552
      %v1554 = vpop.f32.mrb[0].mxu0
      %v1555 = vpop.f32.mrb[0].mxu0
      %v1556 = vadd.f32 %v1459, %v1555
      %v1557 = vpop.f32.mrb[0].mxu0
      %1558 = vmatprep.mubr.bf16.mxu0 0
      %1559 = vmatmul.mubr.bf16.gmra.mrb[0].mxu0 %v1179
      %v1560 = vpop.f32.mrb[0].mxu0
      %v1561 = vadd.f32 %v1464, %v1560
      %v1562 = vpop.f32.mrb[0].mxu0
      %v1563 = vpop.f32.mrb[0].mxu0
      %v1564 = vadd.f32 %v1467, %v1563
      %v1565 = vpop.f32.mrb[0].mxu0
      %1566 = vdwg.mxu0
      %v1567 = vadd.f32 %v1090, %v1505
      %v1568 = vadd.f32 %v1093, %v1508
      %v1569 = vadd.f32 %v1098, %v1513
      %v1570 = vadd.f32 %v1101, %v1516
      %v1571 = vadd.f32 %v1106, %v1521
      %v1572 = vadd.f32 %v1109, %v1524
      %v1573 = vadd.f32 %v1114, %v1529
      %v1574 = vadd.f32 %v1117, %v1532
      %v1575 = vadd.f32 %v1122, %v1537
      %v1576 = vadd.f32 %v1125, %v1540
      %v1577 = vadd.f32 %v1130, %v1545
      %v1578 = vadd.f32 %v1133, %v1548
      %v1579 = vadd.f32 %v1138, %v1553
      %v1580 = vadd.f32 %v1141, %v1556
      %v1581 = vadd.f32 %v1146, %v1561
      %v1582 = vadd.f32 %v1149, %v1564
      %1583 = vst [vmem:[%s221] sm:$0xff] %v1567
      %1584 = vst [vmem:[%s221 + $0x8] sm:$0xff] %v1568
      %1585 = vst [vmem:[%s221 + $0x10] sm:$0xff] %v1569
      %1586 = vst [vmem:[%s221 + $0x18] sm:$0xff] %v1570
      %1587 = vst [vmem:[%s221 + $0x20] sm:$0xff] %v1571
      %1588 = vst [vmem:[%s221 + $0x28] sm:$0xff] %v1572
      %1589 = vst [vmem:[%s221 + $0x30] sm:$0xff] %v1573
      %1590 = vst [vmem:[%s221 + $0x38] sm:$0xff] %v1574
      %1591 = vst [vmem:[%s221 + $0x40] sm:$0xff] %v1575
      %1592 = vst [vmem:[%s221 + $0x48] sm:$0xff] %v1576
      %1593 = vst [vmem:[%s221 + $0x50] sm:$0xff] %v1577
      %1594 = vst [vmem:[%s221 + $0x58] sm:$0xff] %v1578
      %1595 = vst [vmem:[%s221 + $0x60] sm:$0xff] %v1579
      %1596 = vst [vmem:[%s221 + $0x68] sm:$0xff] %v1580
      %1597 = vst [vmem:[%s221 + $0x70] sm:$0xff] %v1581
      %1598 = vst [vmem:[%s221 + $0x78] sm:$0xff] %v1582
      %s1599 = smul.u32 8, %s20
      %p1600 = scmp.lt.s32.totalorder %s19, 1
      %s1601 = scalar_select %p1600, %s19, 1
      %p1602 = scmp.lt.s32.totalorder %s1599, 15
      %s1603 = scalar_select %p1602, %s1599, 15
      %s1604 = smul.addr %s1603, 2
      %s1605 = smul.addr %s1601, 32
      %s1606 = sadd.s32 %s1604, %s1605
      %s1607 = smul.addr %s1606, 8
      %s1608 = scalar_lea.vmem %s4, %s1607
      // Predicated region
      $region48: #{conv3d_block_forward.1} parent=35 // pred_check
        %p1609 = pneg %p136
      $region49: #{conv3d_block_forward.1} parent=35 // pred_check_branch
        %1611 = sbr.rel (%p1609) target = $region51
      $region50: #{conv3d_block_forward.1} parent=35 // pred_region
        %s1612 = smul.u32 8, %s20
      $region51: #{conv3d_block_forward.1} parent=35 // pred_fallthru
        _
    $region36: #{conv3d_block_forward.1} parent=5 // pred_fallthru
      _
    %p1613 = scmp.le.s32.totalorder 2, %s10
    // Predicated region
    $region52: #{conv3d_block_forward.1} parent=5 // pred_check
      %p1614 = pneg %p1613
    $region53: #{conv3d_block_forward.1} parent=5 // pred_check_branch
      %1616 = sbr.rel (%p1614) target = $region55
    $region54: #{conv3d_block_forward.1} parent=5 // pred_region
      %s1617 = ssub.s32 %s10, 2
      // Predicated region
      $region56: #{conv3d_block_forward.1} parent=54 // pred_check
        %p1618 = pneg %p142
      $region57: #{conv3d_block_forward.1} parent=54 // pred_check_branch
        %1620 = sbr.rel (%p1618) target = $region59
      $region58: #{conv3d_block_forward.1} parent=54 // pred_region
        %s1621 = smul.u32 8, %s22
        %p1622 = scmp.lt.s32.totalorder %s21, 1
        %s1623 = scalar_select %p1622, %s21, 1
        %p1624 = scmp.lt.s32.totalorder %s1621, 15
        %s1625 = scalar_select %p1624, %s1621, 15
        %s1626 = smul.addr %s1625, 2
        %s1627 = smul.addr %s1623, 32
        %s1628 = sadd.s32 %s1626, %s1627
        %s1629 = smul.addr %s1628, 8
        %s1630 = scalar_lea.vmem %s4, %s1629
      $region59: #{conv3d_block_forward.1} parent=54 // pred_fallthru
        _
    $region55: #{conv3d_block_forward.1} parent=5 // pred_fallthru
      _
  $region6: #{conv3d_block_forward.1} parent=0 // loop_footer
    %s14 = sadd.s32 1, %s10
  $region7: #{conv3d_block_forward.1} parent=0 // loop_footer_branch
    %9 = sbr.rel target = $region3
  $region8: #{conv3d_block_forward.1} parent=0 // loop_exit
    _

</llo_original>
